<compile_context>
chip_gen: v7x
topology: tpu7x:2x2x1
jax: 0.10.0
libtpu: 0.0.40
codegen_flags: <defaults>
</compile_context>

<pallas_src>
import functools

import jax
import jax.numpy as jnp
from jax.experimental import pallas as pl
from jax.experimental.pallas import tpu as pltpu

FP = 128  # padded feature / hidden / class width (lane-dense)


def _round_up(x, m):
    return ((x + m - 1) // m) * m


# ----------------------------------------------------------------------------
# Fused kernel: whole layer stack in one pallas_call (small graphs).
# ----------------------------------------------------------------------------
def _graphsage_fused_kernel(a_ref, h0_ref, invd_ref, ws_ref, wn_ref, b_ref,
                            o_ref, *, n_layers: int):
    inv_deg = invd_ref[...]                        # (Npad, 1) f32, exact 1/clamp(deg,1)
    h = h0_ref[...]                                # (Npad, FP) f32

    for li in range(n_layers):
        h_bf = h.astype(jnp.bfloat16)

        # Mean aggregation: bf16 adjacency (exact 0/1) x bf16 activations, f32 acc,
        # scaled by the precomputed exact f32 reciprocal degree.
        agg = jnp.dot(a_ref[...], h_bf,
                      preferred_element_type=jnp.float32) * inv_deg      # (Npad, FP)

        # Two K=128 projections accumulated in f32 (no scratch store/reload).
        out = (jnp.dot(h_bf, ws_ref[li], preferred_element_type=jnp.float32)
               + jnp.dot(agg.astype(jnp.bfloat16), wn_ref[li],
                         preferred_element_type=jnp.float32)
               + b_ref[li])                                              # (Npad, FP)

        if li < n_layers - 1:          # activation on all but the last layer
            out = jnp.maximum(out, 0.0)
        h = out

    o_ref[...] = h.astype(o_ref.dtype)


def _fused_vmem_limit(npad, n_layers):
    io_bytes = (2 * npad * npad * 2                # adjacency bf16 (double-buffered)
                + 2 * npad * FP * 4                # h0 f32
                + 2 * npad * 4                     # inv_deg f32
                + 2 * 2 * n_layers * FP * FP * 2   # W_self / W_neigh stacks bf16
                + 2 * n_layers * FP * 4            # bias f32
                + 2 * npad * FP * 4)               # output f32
    live = 4 * npad * FP * 4                       # per-layer h / agg / out values
    return int(min(100 << 20, max(32 << 20, 2 * (io_bytes + live))))


def graphsage_forward_fused(adj, features, params):
    n = features.shape[0]
    n_classes = params[-1][0].shape[1]
    npad, adj_bf, inv_deg, feat_p, ws, wn, b = _prepare(adj, features, params)
    n_layers = ws.shape[0]

    kernel = functools.partial(_graphsage_fused_kernel, n_layers=n_layers)
    out_p = pl.pallas_call(
        kernel,
        out_shape=jax.ShapeDtypeStruct((npad, FP), jnp.float32),
        grid=(1,),
        in_specs=[
            pl.BlockSpec((npad, npad), lambda i: (0, 0)),                 # A (bf16)
            pl.BlockSpec((npad, FP), lambda i: (0, 0)),                   # h0 (f32)
            pl.BlockSpec((npad, 1), lambda i: (0, 0)),                    # inv_deg
            pl.BlockSpec((n_layers, FP, FP), lambda i: (0, 0, 0)),        # W_self
            pl.BlockSpec((n_layers, FP, FP), lambda i: (0, 0, 0)),        # W_neigh
            pl.BlockSpec((n_layers, 1, FP), lambda i: (0, 0, 0)),         # bias
        ],
        out_specs=pl.BlockSpec((npad, FP), lambda i: (0, 0)),
        compiler_params=pltpu.CompilerParams(
            dimension_semantics=("arbitrary",),
            vmem_limit_bytes=_fused_vmem_limit(npad, n_layers)),
    )(adj_bf, feat_p, inv_deg, ws, wn, b)

    return out_p[:n, :n_classes]


# ----------------------------------------------------------------------------
# Row-tiled per-layer kernel (large graphs): grid = (dst-row tiles, src tiles).
# Row axis "parallel" (shards across v7x's two TensorCores), contraction axis
# "arbitrary" with an f32 VMEM accumulator.
# ----------------------------------------------------------------------------
def _sage_layer_kernel(a_ref, hsrc_ref, hself_ref, invd_ref, ws_ref, wn_ref,
                       b_ref, o_ref, acc_ref, *, apply_relu: bool):
    k = pl.program_id(1)

    @pl.when(k == 0)
    def _():
        acc_ref[...] = jnp.zeros_like(acc_ref)

    acc_ref[...] += jnp.dot(a_ref[...], hsrc_ref[...],
                            preferred_element_type=jnp.float32)

    @pl.when(k == pl.num_programs(1) - 1)
    def _():
        agg_bf = (acc_ref[...] * invd_ref[...]).astype(jnp.bfloat16)
        out = (jnp.dot(hself_ref[...], ws_ref[...],
                       preferred_element_type=jnp.float32)
               + jnp.dot(agg_bf, wn_ref[...],
                         preferred_element_type=jnp.float32)
               + b_ref[...])
        if apply_relu:
            out = jnp.maximum(out, 0.0)
        o_ref[...] = out.astype(o_ref.dtype)


def _tiled_vmem_limit(tm, tk):
    io_bytes = (2 * tm * tk * 2            # adjacency tile bf16
                + 2 * tk * FP * 2          # h source tile bf16
                + 2 * tm * FP * 2          # h self tile bf16
                + 2 * tm * 4               # inv_deg tile
                + 2 * 2 * FP * FP * 2      # W_self / W_neigh
                + 2 * FP * 4               # bias
                + 2 * tm * FP * 4)         # output tile
    scratch = tm * FP * 4
    live = 3 * tm * FP * 4
    return int(min(100 << 20, max(32 << 20, 4 * (io_bytes + scratch + live))))


def _sage_layer_tiled(adj_bf, h_bf, inv_deg, ws, wn, b, *, apply_relu, tm, tk):
    npad = adj_bf.shape[0]
    grid = (npad // tm, npad // tk)
    kernel = functools.partial(_sage_layer_kernel, apply_relu=apply_relu)
    return pl.pallas_call(
        kernel,
        out_shape=jax.ShapeDtypeStruct((npad, FP), jnp.float32),
        grid_spec=pltpu.PrefetchScalarGridSpec(
            num_scalar_prefetch=0,
            grid=grid,
            in_specs=[
                pl.BlockSpec((tm, tk), lambda i, k: (i, k)),     # A tile (bf16)
                pl.BlockSpec((tk, FP), lambda i, k: (k, 0)),     # h (source rows)
                pl.BlockSpec((tm, FP), lambda i, k: (i, 0)),     # h (self rows)
                pl.BlockSpec((tm, 1), lambda i, k: (i, 0)),      # inv_deg
                pl.BlockSpec((FP, FP), lambda i, k: (0, 0)),     # W_self
                pl.BlockSpec((FP, FP), lambda i, k: (0, 0)),     # W_neigh
                pl.BlockSpec((1, FP), lambda i, k: (0, 0)),      # bias
            ],
            out_specs=pl.BlockSpec((tm, FP), lambda i, k: (i, 0)),
            scratch_shapes=[pltpu.VMEM((tm, FP), jnp.float32)],
        ),
        compiler_params=pltpu.CompilerParams(
            dimension_semantics=("parallel", "arbitrary"),
            vmem_limit_bytes=_tiled_vmem_limit(tm, tk)),
    )(adj_bf, h_bf, h_bf, inv_deg, ws, wn, b)


def graphsage_forward_tiled(adj, features, params):
    n = features.shape[0]
    n_classes = params[-1][0].shape[1]
    npad, adj_bf, inv_deg, feat_p, ws, wn, b = _prepare(adj, features, params)
    n_layers = ws.shape[0]

    # tm=256 fills the 256-wide MXU on v6e/v7x; 128 otherwise (and on v5e).
    tm = 256 if npad % 256 == 0 else 128
    tk = 256 if npad % 256 == 0 else 128

    h = feat_p
    for li in range(n_layers):
        h = _sage_layer_tiled(adj_bf, h.astype(jnp.bfloat16), inv_deg,
                              ws[li], wn[li], b[li],
                              apply_relu=(li < n_layers - 1), tm=tm, tk=tk)
    return h[:n, :n_classes]


# ----------------------------------------------------------------------------
# Shared wrapper-side preparation (padding, bf16 adjacency, exact inv-degree).
# ----------------------------------------------------------------------------
def _prepare(adj, features, params):
    n, f_in = features.shape
    npad = _round_up(max(n, 8), 128)

    adj_p = jnp.zeros((npad, npad), jnp.float32).at[:n, :n].set(adj)
    deg = jnp.sum(adj_p, axis=1, keepdims=True)              # (npad, 1)
    inv_deg = 1.0 / jnp.maximum(deg, 1.0)                     # exact f32 divide
    adj_bf = adj_p.astype(jnp.bfloat16)                       # 0/1 exact in bf16

    feat_p = jnp.zeros((npad, FP), jnp.float32).at[:n, :f_in].set(features)
    ws, wn, b = _pack_params(params)
    return npad, adj_bf, inv_deg, feat_p, ws, wn, b


def _pack_params(params, fp=FP):
    """Zero-pad each layer's weights/bias to (FP, FP)/(1, FP) and stack.

    Padded rows/columns are exactly zero, so padded feature columns stay zero
    through matmul + bias + relu for the whole stack.
    """
    ws_l, wn_l, b_l = [], [], []
    for w_self, w_neigh, b in params:
        f_in, f_out = w_self.shape
        ws_l.append(jnp.zeros((fp, fp), jnp.float32).at[:f_in, :f_out].set(w_self))
        wn_l.append(jnp.zeros((fp, fp), jnp.float32).at[:f_in, :f_out].set(w_neigh))
        b_l.append(jnp.zeros((1, fp), jnp.float32).at[0, :f_out].set(b))
    return (jnp.stack(ws_l).astype(jnp.bfloat16),    # (L, FP, FP) bf16
            jnp.stack(wn_l).astype(jnp.bfloat16),    # (L, FP, FP) bf16
            jnp.stack(b_l))                          # (L, 1, FP)  f32


def graphsage_forward(adj, features, params, *, force_tiled=False):
    """Full GraphSAGE forward. Fused single-call path for small graphs; row-tiled
    per-layer path once the dense padded adjacency no longer comfortably fits
    VMEM (conservative threshold so it also holds on v7x's 64 MiB budget)."""
    npad = _round_up(max(features.shape[0], 8), 128)
    if force_tiled or npad > 1024:
        return graphsage_forward_tiled(adj, features, params)
    return graphsage_forward_fused(adj, features, params)


def init_params(key, in_feats, n_hidden, n_classes, n_layers):
    """Deterministic (Xavier-uniform-style) parameter init for all layers."""
    dims = [in_feats] + [n_hidden] * n_layers + [n_classes]
    params = []
    for li in range(len(dims) - 1):
        f_in, f_out = dims[li], dims[li + 1]
        key, k1, k2 = jax.random.split(key, 3)
        scale = (6.0 / (f_in + f_out)) ** 0.5
        w_self = jax.random.uniform(k1, (f_in, f_out), jnp.float32, -scale, scale)
        w_neigh = jax.random.uniform(k2, (f_in, f_out), jnp.float32, -scale, scale)
        b = jnp.zeros((f_out,), jnp.float32)
        params.append((w_self, w_neigh, b))
    return params


if __name__ == "__main__":
    # Small, TPU-friendly shapes consistent with the module's forward:
    N = 64          # number of graph nodes
    IN_FEATS = 16
    N_HIDDEN = 32
    N_CLASSES = 8
    N_LAYERS = 2    # module builds n_layers + 1 SAGEConv layers total

    key = jax.random.PRNGKey(0)
    k_adj, k_feat, k_param = jax.random.split(key, 3)

    # Random sparse-ish adjacency (dense representation), ~20% edges, no self loops.
    adj = (jax.random.uniform(k_adj, (N, N)) < 0.2).astype(jnp.float32)
    adj = adj * (1.0 - jnp.eye(N, dtype=jnp.float32))

    features = jax.random.normal(k_feat, (N, IN_FEATS), jnp.float32)
    params = init_params(k_param, IN_FEATS, N_HIDDEN, N_CLASSES, N_LAYERS)

    out_fused = jax.block_until_ready(graphsage_forward(adj, features, params))
    out_tiled = jax.block_until_ready(
        graphsage_forward(adj, features, params, force_tiled=True))

    assert out_fused.shape == (N, N_CLASSES), out_fused.shape
    assert out_tiled.shape == (N, N_CLASSES), out_tiled.shape
    diff = float(jnp.max(jnp.abs(out_fused - out_tiled)))
    scale = max(float(jnp.max(jnp.abs(out_fused))), 1.0)
    assert diff <= 5e-2 * scale, (diff, scale)
    print("KERNEL_OK")
</pallas_src>

<mosaic_0001>
module attributes {stable_mosaic.version = 11 : i64} {
  func.func @_graphsage_fused_kernel(%arg0: i32, %arg1: memref<128x128xbf16, #tpu.memory_space<vmem>>, %arg2: memref<128x128xf32, #tpu.memory_space<vmem>>, %arg3: memref<128x1xf32, #tpu.memory_space<vmem>>, %arg4: memref<3x128x128xbf16, #tpu.memory_space<vmem>>, %arg5: memref<3x128x128xbf16, #tpu.memory_space<vmem>>, %arg6: memref<3x1x128xf32, #tpu.memory_space<vmem>>, %arg7: memref<128x128xf32, #tpu.memory_space<vmem>>) attributes {dimension_semantics = [#tpu.dimension_semantics<arbitrary>], iteration_bounds = array<i64: 1>, scalar_prefetch = 0 : i64, scratch_operands = 0 : i64, tpu.core_type = #tpu.core_type<tc>, window_params = [{pipeline_mode = #tpu.pipeline_mode<synchronous>, transform_indices = @transform_0, window_bounds = array<i64: 128, 128>}, {pipeline_mode = #tpu.pipeline_mode<synchronous>, transform_indices = @transform_1, window_bounds = array<i64: 128, 128>}, {pipeline_mode = #tpu.pipeline_mode<synchronous>, transform_indices = @transform_2, window_bounds = array<i64: 128, 1>}, {pipeline_mode = #tpu.pipeline_mode<synchronous>, transform_indices = @transform_3, window_bounds = array<i64: 3, 128, 128>}, {pipeline_mode = #tpu.pipeline_mode<synchronous>, transform_indices = @transform_4, window_bounds = array<i64: 3, 128, 128>}, {pipeline_mode = #tpu.pipeline_mode<synchronous>, transform_indices = @transform_5, window_bounds = array<i64: 3, 1, 128>}, {pipeline_mode = #tpu.pipeline_mode<synchronous>, transform_indices = @transform_6, window_bounds = array<i64: 128, 128>}]} {
    %c0 = arith.constant 0 : index
    %c0_0 = arith.constant 0 : index
    %0 = vector.load %arg3[%c0, %c0_0] : memref<128x1xf32, #tpu.memory_space<vmem>>, vector<128x1xf32>
    %c0_1 = arith.constant 0 : index
    %c0_2 = arith.constant 0 : index
    %1 = vector.load %arg2[%c0_1, %c0_2] : memref<128x128xf32, #tpu.memory_space<vmem>>, vector<128x128xf32>
    %2 = arith.truncf %1 : vector<128x128xf32> to vector<128x128xbf16>
    %c0_3 = arith.constant 0 : index
    %c0_4 = arith.constant 0 : index
    %3 = vector.load %arg1[%c0_3, %c0_4] : memref<128x128xbf16, #tpu.memory_space<vmem>>, vector<128x128xbf16>
    %cst = arith.constant dense<0.000000e+00> : vector<128x128xf32>
    %4 = tpu.matmul %3, %2, %cst {dimension_numbers = #tpu.dot_dimension_numbers<[1], [0], [0], [1], [0, 0, 1, 1], [], []>} : vector<128x128xbf16>, vector<128x128xbf16>, vector<128x128xf32> -> vector<128x128xf32>
    %5 = vector.broadcast %0 : vector<128x1xf32> to vector<128x128xf32>
    %6 = arith.mulf %4, %5 : vector<128x128xf32>
    %c0_5 = arith.constant 0 : index
    %c0_6 = arith.constant 0 : index
    %c0_7 = arith.constant 0 : index
    %7 = vector.load %arg4[%c0_5, %c0_6, %c0_7] : memref<3x128x128xbf16, #tpu.memory_space<vmem>>, vector<1x128x128xbf16>
    %8 = vector.shape_cast %7 : vector<1x128x128xbf16> to vector<128x128xbf16>
    %cst_8 = arith.constant dense<0.000000e+00> : vector<128x128xf32>
    %9 = tpu.matmul %2, %8, %cst_8 {dimension_numbers = #tpu.dot_dimension_numbers<[1], [0], [0], [1], [0, 0, 1, 1], [], []>} : vector<128x128xbf16>, vector<128x128xbf16>, vector<128x128xf32> -> vector<128x128xf32>
    %10 = arith.truncf %6 : vector<128x128xf32> to vector<128x128xbf16>
    %c0_9 = arith.constant 0 : index
    %c0_10 = arith.constant 0 : index
    %c0_11 = arith.constant 0 : index
    %11 = vector.load %arg5[%c0_9, %c0_10, %c0_11] : memref<3x128x128xbf16, #tpu.memory_space<vmem>>, vector<1x128x128xbf16>
    %12 = vector.shape_cast %11 : vector<1x128x128xbf16> to vector<128x128xbf16>
    %cst_12 = arith.constant dense<0.000000e+00> : vector<128x128xf32>
    %13 = tpu.matmul %10, %12, %cst_12 {dimension_numbers = #tpu.dot_dimension_numbers<[1], [0], [0], [1], [0, 0, 1, 1], [], []>} : vector<128x128xbf16>, vector<128x128xbf16>, vector<128x128xf32> -> vector<128x128xf32>
    %14 = arith.addf %9, %13 : vector<128x128xf32>
    %c0_13 = arith.constant 0 : index
    %c0_14 = arith.constant 0 : index
    %c0_15 = arith.constant 0 : index
    %15 = vector.load %arg6[%c0_13, %c0_14, %c0_15] : memref<3x1x128xf32, #tpu.memory_space<vmem>>, vector<1x1x128xf32>
    %16 = vector.shape_cast %15 : vector<1x1x128xf32> to vector<1x128xf32>
    %17 = vector.broadcast %16 : vector<1x128xf32> to vector<128x128xf32>
    %18 = arith.addf %14, %17 : vector<128x128xf32>
    %cst_16 = arith.constant 0.000000e+00 : f32
    %19 = vector.broadcast %cst_16 : f32 to vector<128x128xf32>
    %20 = arith.maximumf %18, %19 : vector<128x128xf32>
    %21 = arith.truncf %20 : vector<128x128xf32> to vector<128x128xbf16>
    %c0_17 = arith.constant 0 : index
    %c0_18 = arith.constant 0 : index
    %22 = vector.load %arg1[%c0_17, %c0_18] : memref<128x128xbf16, #tpu.memory_space<vmem>>, vector<128x128xbf16>
    %cst_19 = arith.constant dense<0.000000e+00> : vector<128x128xf32>
    %23 = tpu.matmul %22, %21, %cst_19 {dimension_numbers = #tpu.dot_dimension_numbers<[1], [0], [0], [1], [0, 0, 1, 1], [], []>} : vector<128x128xbf16>, vector<128x128xbf16>, vector<128x128xf32> -> vector<128x128xf32>
    %24 = vector.broadcast %0 : vector<128x1xf32> to vector<128x128xf32>
    %25 = arith.mulf %23, %24 : vector<128x128xf32>
    %c1 = arith.constant 1 : index
    %c0_20 = arith.constant 0 : index
    %c0_21 = arith.constant 0 : index
    %26 = vector.load %arg4[%c1, %c0_20, %c0_21] : memref<3x128x128xbf16, #tpu.memory_space<vmem>>, vector<1x128x128xbf16>
    %27 = vector.shape_cast %26 : vector<1x128x128xbf16> to vector<128x128xbf16>
    %cst_22 = arith.constant dense<0.000000e+00> : vector<128x128xf32>
    %28 = tpu.matmul %21, %27, %cst_22 {dimension_numbers = #tpu.dot_dimension_numbers<[1], [0], [0], [1], [0, 0, 1, 1], [], []>} : vector<128x128xbf16>, vector<128x128xbf16>, vector<128x128xf32> -> vector<128x128xf32>
    %29 = arith.truncf %25 : vector<128x128xf32> to vector<128x128xbf16>
    %c1_23 = arith.constant 1 : index
    %c0_24 = arith.constant 0 : index
    %c0_25 = arith.constant 0 : index
    %30 = vector.load %arg5[%c1_23, %c0_24, %c0_25] : memref<3x128x128xbf16, #tpu.memory_space<vmem>>, vector<1x128x128xbf16>
    %31 = vector.shape_cast %30 : vector<1x128x128xbf16> to vector<128x128xbf16>
    %cst_26 = arith.constant dense<0.000000e+00> : vector<128x128xf32>
    %32 = tpu.matmul %29, %31, %cst_26 {dimension_numbers = #tpu.dot_dimension_numbers<[1], [0], [0], [1], [0, 0, 1, 1], [], []>} : vector<128x128xbf16>, vector<128x128xbf16>, vector<128x128xf32> -> vector<128x128xf32>
    %33 = arith.addf %28, %32 : vector<128x128xf32>
    %c1_27 = arith.constant 1 : index
    %c0_28 = arith.constant 0 : index
    %c0_29 = arith.constant 0 : index
    %34 = vector.load %arg6[%c1_27, %c0_28, %c0_29] : memref<3x1x128xf32, #tpu.memory_space<vmem>>, vector<1x1x128xf32>
    %35 = vector.shape_cast %34 : vector<1x1x128xf32> to vector<1x128xf32>
    %36 = vector.broadcast %35 : vector<1x128xf32> to vector<128x128xf32>
    %37 = arith.addf %33, %36 : vector<128x128xf32>
    %cst_30 = arith.constant 0.000000e+00 : f32
    %38 = vector.broadcast %cst_30 : f32 to vector<128x128xf32>
    %39 = arith.maximumf %37, %38 : vector<128x128xf32>
    %40 = arith.truncf %39 : vector<128x128xf32> to vector<128x128xbf16>
    %c0_31 = arith.constant 0 : index
    %c0_32 = arith.constant 0 : index
    %41 = vector.load %arg1[%c0_31, %c0_32] : memref<128x128xbf16, #tpu.memory_space<vmem>>, vector<128x128xbf16>
    %cst_33 = arith.constant dense<0.000000e+00> : vector<128x128xf32>
    %42 = tpu.matmul %41, %40, %cst_33 {dimension_numbers = #tpu.dot_dimension_numbers<[1], [0], [0], [1], [0, 0, 1, 1], [], []>} : vector<128x128xbf16>, vector<128x128xbf16>, vector<128x128xf32> -> vector<128x128xf32>
    %43 = vector.broadcast %0 : vector<128x1xf32> to vector<128x128xf32>
    %44 = arith.mulf %42, %43 : vector<128x128xf32>
    %c2 = arith.constant 2 : index
    %c0_34 = arith.constant 0 : index
    %c0_35 = arith.constant 0 : index
    %45 = vector.load %arg4[%c2, %c0_34, %c0_35] : memref<3x128x128xbf16, #tpu.memory_space<vmem>>, vector<1x128x128xbf16>
    %46 = vector.shape_cast %45 : vector<1x128x128xbf16> to vector<128x128xbf16>
    %cst_36 = arith.constant dense<0.000000e+00> : vector<128x128xf32>
    %47 = tpu.matmul %40, %46, %cst_36 {dimension_numbers = #tpu.dot_dimension_numbers<[1], [0], [0], [1], [0, 0, 1, 1], [], []>} : vector<128x128xbf16>, vector<128x128xbf16>, vector<128x128xf32> -> vector<128x128xf32>
    %48 = arith.truncf %44 : vector<128x128xf32> to vector<128x128xbf16>
    %c2_37 = arith.constant 2 : index
    %c0_38 = arith.constant 0 : index
    %c0_39 = arith.constant 0 : index
    %49 = vector.load %arg5[%c2_37, %c0_38, %c0_39] : memref<3x128x128xbf16, #tpu.memory_space<vmem>>, vector<1x128x128xbf16>
    %50 = vector.shape_cast %49 : vector<1x128x128xbf16> to vector<128x128xbf16>
    %cst_40 = arith.constant dense<0.000000e+00> : vector<128x128xf32>
    %51 = tpu.matmul %48, %50, %cst_40 {dimension_numbers = #tpu.dot_dimension_numbers<[1], [0], [0], [1], [0, 0, 1, 1], [], []>} : vector<128x128xbf16>, vector<128x128xbf16>, vector<128x128xf32> -> vector<128x128xf32>
    %52 = arith.addf %47, %51 : vector<128x128xf32>
    %c2_41 = arith.constant 2 : index
    %c0_42 = arith.constant 0 : index
    %c0_43 = arith.constant 0 : index
    %53 = vector.load %arg6[%c2_41, %c0_42, %c0_43] : memref<3x1x128xf32, #tpu.memory_space<vmem>>, vector<1x1x128xf32>
    %54 = vector.shape_cast %53 : vector<1x1x128xf32> to vector<1x128xf32>
    %55 = vector.broadcast %54 : vector<1x128xf32> to vector<128x128xf32>
    %56 = arith.addf %52, %55 : vector<128x128xf32>
    %c0_44 = arith.constant 0 : index
    %c0_45 = arith.constant 0 : index
    %57 = vector.load %arg7[%c0_44, %c0_45] : memref<128x128xf32, #tpu.memory_space<vmem>>, vector<128x128xf32>
    tpu.vector_store %arg7[%c0_44, %c0_45], %56 {strides = array<i32>} : memref<128x128xf32, #tpu.memory_space<vmem>>, vector<128x128xf32>,
    return
  }
  func.func @transform_0(%arg0: i32) -> (i32, i32) {
    %c0_i32 = arith.constant 0 : i32
    %c0_i32_0 = arith.constant 0 : i32
    %c0_i32_1 = arith.constant 0 : i32
    return %c0_i32, %c0_i32_0 : i32, i32
  }
  func.func @transform_1(%arg0: i32) -> (i32, i32) {
    %c0_i32 = arith.constant 0 : i32
    %c0_i32_0 = arith.constant 0 : i32
    %c0_i32_1 = arith.constant 0 : i32
    return %c0_i32, %c0_i32_0 : i32, i32
  }
  func.func @transform_2(%arg0: i32) -> (i32, i32) {
    %c0_i32 = arith.constant 0 : i32
    %c0_i32_0 = arith.constant 0 : i32
    %c0_i32_1 = arith.constant 0 : i32
    return %c0_i32, %c0_i32_0 : i32, i32
  }
  func.func @transform_3(%arg0: i32) -> (i32, i32, i32) {
    %c0_i32 = arith.constant 0 : i32
    %c0_i32_0 = arith.constant 0 : i32
    %c0_i32_1 = arith.constant 0 : i32
    %c0_i32_2 = arith.constant 0 : i32
    return %c0_i32, %c0_i32_0, %c0_i32_1 : i32, i32, i32
  }
  func.func @transform_4(%arg0: i32) -> (i32, i32, i32) {
    %c0_i32 = arith.constant 0 : i32
    %c0_i32_0 = arith.constant 0 : i32
    %c0_i32_1 = arith.constant 0 : i32
    %c0_i32_2 = arith.constant 0 : i32
    return %c0_i32, %c0_i32_0, %c0_i32_1 : i32, i32, i32
  }
  func.func @transform_5(%arg0: i32) -> (i32, i32, i32) {
    %c0_i32 = arith.constant 0 : i32
    %c0_i32_0 = arith.constant 0 : i32
    %c0_i32_1 = arith.constant 0 : i32
    %c0_i32_2 = arith.constant 0 : i32
    return %c0_i32, %c0_i32_0, %c0_i32_1 : i32, i32, i32
  }
  func.func @transform_6(%arg0: i32) -> (i32, i32) {
    %c0_i32 = arith.constant 0 : i32
    %c0_i32_0 = arith.constant 0 : i32
    %c0_i32_1 = arith.constant 0 : i32
    return %c0_i32, %c0_i32_0 : i32, i32
  }
}

</mosaic_0001>

<llo_original>
// kernel: tpu_custom_call.1
$region0: #{tpu_custom_call.1}
  #allocation0 [shape = 'u32[]', space=smem, size = 0x4, offset = 0x4, fixed_abs, tag = 'smem constant byte address 0x4 - core index']
  #allocation1 [shape = 'u32[144,128]{1,0:T(1,128)}', space=vmem, size = 0x12000, scoped, tag = 'internal scratch']
  %s0 = inlined_call_operand.hbm [shape: bf16[128,128], index: 0, kind: input, shape index: {}]
  %s1 = inlined_call_operand.vmem [shape: f32[128,128], index: 1, kind: input, shape index: {}]
  %s2 = inlined_call_operand.vmem [shape: f32[128,1], index: 2, kind: input, shape index: {}]
  %s3 = inlined_call_operand.hbm [shape: bf16[3,128,128], index: 3, kind: input, shape index: {}]
  %s4 = inlined_call_operand.hbm [shape: bf16[3,128,128], index: 4, kind: input, shape index: {}]
  %s5 = inlined_call_operand.vmem [shape: f32[3,1,128], index: 5, kind: input, shape index: {}]
  %s6 = inlined_call_operand.hbm [shape: f32[128,128], index: 6, kind: output, shape index: {}]
  %s7 = sld [smem:[#allocation0]]
  $region46: #{tpu_custom_call.1} parent=0
    _
  %s9 = ssub.s32 1, %s7
  %s10 = scalar_select 0, %s9, %s7
  $region1: #{tpu_custom_call.1} parent=0
    #allocation2 [shape = 'u8[32768]{0}', space=vmem, size = 0x8000, scoped, tag = 'input window, operand 0, single buffered']
    #allocation3 [shape = 's32[1]{0}', space=sflag, size = 0x4, scoped, tag = 'scoped memory for tpu_custom_call.1']
    #allocation4 [shape = 's32[1]{0}', space=sflag, size = 0x4, scoped, tag = 'scoped memory for tpu_custom_call.1']
    #allocation5 [shape = 'u8[98304]{0}', space=vmem, size = 0x18000, scoped, tag = 'input window, operand 3, single buffered']
    #allocation6 [shape = 's32[1]{0}', space=sflag, size = 0x4, scoped, tag = 'scoped memory for tpu_custom_call.1']
    #allocation7 [shape = 'u8[98304]{0}', space=vmem, size = 0x18000, scoped, tag = 'input window, operand 4, single buffered']
    #allocation8 [shape = 'u8[65536]{0}', space=vmem, size = 0x10000, scoped, tag = 'output window, operand 0, single buffered']
    %11 = vsyncpa [#allocation3], 0
    %12 = vsyncpa [#allocation6], 0
    %13 = vsyncpa [#allocation4], 0
    // Predicated region
    $region2: #{tpu_custom_call.1} parent=1 // pred_check
      _
    $region3: #{tpu_custom_call.1} parent=1 // pred_check_branch
      %15 = sbr.rel (0) target = $region5
    $region4: #{tpu_custom_call.1} parent=1 // pred_region
      %s17 = ssub.s32 1024, 1024
      %18 = vsyncadd [#allocation3], %s17
      %s19 = sshll.u32 [#allocation2], 4
      %s20 = int_to_ptr.vmem [resolvable:$true] %s19
      %25 = dma.hbm_to_vmem [thread:$0]  %s0, 1024, %s20, [#allocation3], 64, 64, 4
    $region5: #{tpu_custom_call.1} parent=1 // pred_fallthru
      _
    // Predicated region
    $region6: #{tpu_custom_call.1} parent=1 // pred_check
      _
    $region7: #{tpu_custom_call.1} parent=1 // pred_check_branch
      %27 = sbr.rel (0) target = $region9
    $region8: #{tpu_custom_call.1} parent=1 // pred_region
      _
    $region9: #{tpu_custom_call.1} parent=1 // pred_fallthru
      _
    // Predicated region
    $region10: #{tpu_custom_call.1} parent=1 // pred_check
      _
    $region11: #{tpu_custom_call.1} parent=1 // pred_check_branch
      %29 = sbr.rel (0) target = $region13
    $region12: #{tpu_custom_call.1} parent=1 // pred_region
      _
    $region13: #{tpu_custom_call.1} parent=1 // pred_fallthru
      _
    // Predicated region
    $region14: #{tpu_custom_call.1} parent=1 // pred_check
      _
    $region15: #{tpu_custom_call.1} parent=1 // pred_check_branch
      %31 = sbr.rel (0) target = $region17
    $region16: #{tpu_custom_call.1} parent=1 // pred_region
      %s33 = ssub.s32 3072, 3072
      %34 = vsyncadd [#allocation6], %s33
      %s35 = sshll.u32 [#allocation5], 4
      %s36 = int_to_ptr.vmem [resolvable:$true] %s35
      %41 = dma.hbm_to_vmem [thread:$0]  %s3, 3072, %s36, [#allocation6], 64, 64, 4
    $region17: #{tpu_custom_call.1} parent=1 // pred_fallthru
      _
    // Predicated region
    $region18: #{tpu_custom_call.1} parent=1 // pred_check
      _
    $region19: #{tpu_custom_call.1} parent=1 // pred_check_branch
      %43 = sbr.rel (0) target = $region21
    $region20: #{tpu_custom_call.1} parent=1 // pred_region
      %s45 = ssub.s32 3072, 3072
      %46 = vsyncadd [#allocation6], %s45
      %s47 = sshll.u32 [#allocation7], 4
      %s48 = int_to_ptr.vmem [resolvable:$true] %s47
      %53 = dma.hbm_to_vmem [thread:$0]  %s4, 3072, %s48, [#allocation6], 64, 64, 4
    $region21: #{tpu_custom_call.1} parent=1 // pred_fallthru
      _
    // Predicated region
    $region22: #{tpu_custom_call.1} parent=1 // pred_check
      _
    $region23: #{tpu_custom_call.1} parent=1 // pred_check_branch
      %55 = sbr.rel (0) target = $region25
    $region24: #{tpu_custom_call.1} parent=1 // pred_region
      _
    $region25: #{tpu_custom_call.1} parent=1 // pred_fallthru
      _
    // Predicated region
    $region26: #{tpu_custom_call.1} parent=1 // pred_check
      _
    $region27: #{tpu_custom_call.1} parent=1 // pred_check_branch
      %57 = sbr.rel (0) target = $region29
    $region28: #{tpu_custom_call.1} parent=1 // pred_region
      %58 = dma.done [#allocation3], 1024
    $region29: #{tpu_custom_call.1} parent=1 // pred_fallthru
      _
    // Predicated region
    $region30: #{tpu_custom_call.1} parent=1 // pred_check
      _
    $region31: #{tpu_custom_call.1} parent=1 // pred_check_branch
      %60 = sbr.rel (0) target = $region33
    $region32: #{tpu_custom_call.1} parent=1 // pred_region
      %61 = dma.done [#allocation6], 3072
    $region33: #{tpu_custom_call.1} parent=1 // pred_fallthru
      _
    // Predicated region
    $region34: #{tpu_custom_call.1} parent=1 // pred_check
      _
    $region35: #{tpu_custom_call.1} parent=1 // pred_check_branch
      %63 = sbr.rel (0) target = $region37
    $region36: #{tpu_custom_call.1} parent=1 // pred_region
      %64 = dma.done [#allocation6], 3072
    $region37: #{tpu_custom_call.1} parent=1 // pred_fallthru
      _
    %v66 = vld [vmem:[%s2] sm:$0xff]
    %v67 = vld [vmem:[%s2 + $0x8] sm:$0xff]
    %v68 = vld [vmem:[%s2 + $0x10] sm:$0xff]
    %v69 = vld [vmem:[%s2 + $0x18] sm:$0xff]
    %v70 = vld [vmem:[%s2 + $0x20] sm:$0xff]
    %v71 = vld [vmem:[%s2 + $0x28] sm:$0xff]
    %v72 = vld [vmem:[%s2 + $0x30] sm:$0xff]
    %v73 = vld [vmem:[%s2 + $0x38] sm:$0xff]
    %v74 = vld [vmem:[%s2 + $0x40] sm:$0xff]
    %v75 = vld [vmem:[%s2 + $0x48] sm:$0xff]
    %v76 = vld [vmem:[%s2 + $0x50] sm:$0xff]
    %v77 = vld [vmem:[%s2 + $0x58] sm:$0xff]
    %v78 = vld [vmem:[%s2 + $0x60] sm:$0xff]
    %v79 = vld [vmem:[%s2 + $0x68] sm:$0xff]
    %v80 = vld [vmem:[%s2 + $0x70] sm:$0xff]
    %v81 = vld [vmem:[%s2 + $0x78] sm:$0xff]
    %v82 = vld [vmem:[%s1] sm:$0xff]
    %v83 = vld [vmem:[%s1 + $0x8] sm:$0xff]
    %v84 = vld [vmem:[%s1 + $0x10] sm:$0xff]
    %v85 = vld [vmem:[%s1 + $0x18] sm:$0xff]
    %v86 = vld [vmem:[%s1 + $0x20] sm:$0xff]
    %v87 = vld [vmem:[%s1 + $0x28] sm:$0xff]
    %v88 = vld [vmem:[%s1 + $0x30] sm:$0xff]
    %v89 = vld [vmem:[%s1 + $0x38] sm:$0xff]
    %v90 = vld [vmem:[%s1 + $0x40] sm:$0xff]
    %v91 = vld [vmem:[%s1 + $0x48] sm:$0xff]
    %v92 = vld [vmem:[%s1 + $0x50] sm:$0xff]
    %v93 = vld [vmem:[%s1 + $0x58] sm:$0xff]
    %v94 = vld [vmem:[%s1 + $0x60] sm:$0xff]
    %v95 = vld [vmem:[%s1 + $0x68] sm:$0xff]
    %v96 = vld [vmem:[%s1 + $0x70] sm:$0xff]
    %v97 = vld [vmem:[%s1 + $0x78] sm:$0xff]
    %v98 = vpack.c.bf16 %v83, %v82
    %v99 = vpack.c.bf16 %v85, %v84
    %v100 = vpack.c.bf16 %v87, %v86
    %v101 = vpack.c.bf16 %v89, %v88
    %v102 = vpack.c.bf16 %v91, %v90
    %v103 = vpack.c.bf16 %v93, %v92
    %v104 = vpack.c.bf16 %v95, %v94
    %v105 = vpack.c.bf16 %v97, %v96
    %v106 = vld [vmem:[#allocation2] sm:$0xf]
    %v107 = vld [vmem:[#allocation2 + $0x4] sm:$0xf]
    %v108 = vld [vmem:[#allocation2 + $0x8] sm:$0xf]
    %v109 = vld [vmem:[#allocation2 + $0xc] sm:$0xf]
    %v110 = vld [vmem:[#allocation2 + $0x10] sm:$0xf]
    %v111 = vld [vmem:[#allocation2 + $0x14] sm:$0xf]
    %v112 = vld [vmem:[#allocation2 + $0x18] sm:$0xf]
    %v113 = vld [vmem:[#allocation2 + $0x1c] sm:$0xf]
    %v114 = vld [vmem:[#allocation2 + $0x20] sm:$0xf]
    %v115 = vld [vmem:[#allocation2 + $0x24] sm:$0xf]
    %v116 = vld [vmem:[#allocation2 + $0x28] sm:$0xf]
    %v117 = vld [vmem:[#allocation2 + $0x2c] sm:$0xf]
    %v118 = vld [vmem:[#allocation2 + $0x30] sm:$0xf]
    %v119 = vld [vmem:[#allocation2 + $0x34] sm:$0xf]
    %v120 = vld [vmem:[#allocation2 + $0x38] sm:$0xf]
    %v121 = vld [vmem:[#allocation2 + $0x3c] sm:$0xf]
    %v138 = vunpack.c.l.b16 %v106
    %v139 = vunpack.c.l.b16 %v107
    %v140 = vunpack.c.l.b16 %v108
    %v141 = vunpack.c.l.b16 %v109
    %v142 = vunpack.c.l.b16 %v110
    %v143 = vunpack.c.l.b16 %v111
    %v144 = vunpack.c.l.b16 %v112
    %v145 = vunpack.c.l.b16 %v113
    %v146 = vunpack.c.l.b16 %v114
    %v147 = vunpack.c.l.b16 %v115
    %v148 = vunpack.c.l.b16 %v116
    %v149 = vunpack.c.l.b16 %v117
    %v150 = vunpack.c.l.b16 %v118
    %v151 = vunpack.c.l.b16 %v119
    %v152 = vunpack.c.l.b16 %v120
    %v153 = vunpack.c.l.b16 %v121
    %v154 = vpack.c.b16 %v139, %v138
    %v155 = vpack.c.b16 %v141, %v140
    %v156 = vpack.c.b16 %v143, %v142
    %v157 = vpack.c.b16 %v145, %v144
    %v158 = vpack.c.b16 %v147, %v146
    %v159 = vpack.c.b16 %v149, %v148
    %v160 = vpack.c.b16 %v151, %v150
    %v161 = vpack.c.b16 %v153, %v152
    %170 = vmatprep.subr.bf16.mxu0 0
    %171 = vmatpush1.bf16.msra.mxu0 %v98
    %172 = vmatprep.subr.bf16.mxu0 0
    %173 = vmatpush1.bf16.msra.mxu0 %v99
    %174 = vmatprep.subr.bf16.mxu0 0
    %175 = vmatpush1.bf16.msra.mxu0 %v100
    %176 = vmatprep.subr.bf16.mxu0 0
    %177 = vmatpush1.bf16.msra.mxu0 %v101
    %178 = vmatprep.subr.bf16.mxu0 0
    %179 = vmatpush1.bf16.msra.mxu0 %v102
    %180 = vmatprep.subr.bf16.mxu0 0
    %181 = vmatpush1.bf16.msra.mxu0 %v103
    %182 = vmatprep.subr.bf16.mxu0 0
    %183 = vmatpush1.bf16.msra.mxu0 %v104
    %184 = vmatprep.subr.bf16.mxu0 0
    %185 = vmatpush1.bf16.msra.mxu0 %v105
    %186 = vmatprep.subr.bf16.mxu0 0
    %187 = vmatpush1.bf16.msra.mxu0 0
    %188 = vmatprep.subr.bf16.mxu0 0
    %189 = vmatpush1.bf16.msra.mxu0 0
    %190 = vmatprep.subr.bf16.mxu0 0
    %191 = vmatpush1.bf16.msra.mxu0 0
    %192 = vmatprep.subr.bf16.mxu0 0
    %193 = vmatpush1.bf16.msra.mxu0 0
    %194 = vmatprep.subr.bf16.mxu0 0
    %195 = vmatpush1.bf16.msra.mxu0 0
    %196 = vmatprep.subr.bf16.mxu0 0
    %197 = vmatpush1.bf16.msra.mxu0 0
    %198 = vmatprep.subr.bf16.mxu0 0
    %199 = vmatpush1.bf16.msra.mxu0 0
    %200 = vmatprep.subr.bf16.mxu0 0
    %201 = vmatpush1.bf16.msra.mxu0 0
    %202 = vmatprep.mubr.bf16.mxu0 0
    %203 = vmatmul.mubr.bf16.gmra.mrb[0].mxu0 %v154
    %v204 = vpop.f32.mrb[0].mxu0
    %v205 = vadd.f32 0.0, %v204
    %v206 = vpop.f32.mrb[0].mxu0
    %v207 = vpop.f32.mrb[0].mxu0
    %v208 = vadd.f32 0.0, %v207
    %v209 = vpop.f32.mrb[0].mxu0
    %210 = vmatprep.mubr.bf16.mxu0 0
    %211 = vmatmul.mubr.bf16.gmra.mrb[0].mxu0 %v155
    %v212 = vpop.f32.mrb[0].mxu0
    %v213 = vadd.f32 0.0, %v212
    %v214 = vpop.f32.mrb[0].mxu0
    %v215 = vpop.f32.mrb[0].mxu0
    %v216 = vadd.f32 0.0, %v215
    %v217 = vpop.f32.mrb[0].mxu0
    %218 = vmatprep.mubr.bf16.mxu0 0
    %219 = vmatmul.mubr.bf16.gmra.mrb[0].mxu0 %v156
    %v220 = vpop.f32.mrb[0].mxu0
    %v221 = vadd.f32 0.0, %v220
    %v222 = vpop.f32.mrb[0].mxu0
    %v223 = vpop.f32.mrb[0].mxu0
    %v224 = vadd.f32 0.0, %v223
    %v225 = vpop.f32.mrb[0].mxu0
    %226 = vmatprep.mubr.bf16.mxu0 0
    %227 = vmatmul.mubr.bf16.gmra.mrb[0].mxu0 %v157
    %v228 = vpop.f32.mrb[0].mxu0
    %v229 = vadd.f32 0.0, %v228
    %v230 = vpop.f32.mrb[0].mxu0
    %v231 = vpop.f32.mrb[0].mxu0
    %v232 = vadd.f32 0.0, %v231
    %v233 = vpop.f32.mrb[0].mxu0
    %234 = vmatprep.mubr.bf16.mxu0 0
    %235 = vmatmul.mubr.bf16.gmra.mrb[0].mxu0 %v158
    %v236 = vpop.f32.mrb[0].mxu0
    %v237 = vadd.f32 0.0, %v236
    %v238 = vpop.f32.mrb[0].mxu0
    %v239 = vpop.f32.mrb[0].mxu0
    %v240 = vadd.f32 0.0, %v239
    %v241 = vpop.f32.mrb[0].mxu0
    %242 = vmatprep.mubr.bf16.mxu0 0
    %243 = vmatmul.mubr.bf16.gmra.mrb[0].mxu0 %v159
    %v244 = vpop.f32.mrb[0].mxu0
    %v245 = vadd.f32 0.0, %v244
    %v246 = vpop.f32.mrb[0].mxu0
    %v247 = vpop.f32.mrb[0].mxu0
    %v248 = vadd.f32 0.0, %v247
    %v249 = vpop.f32.mrb[0].mxu0
    %250 = vmatprep.mubr.bf16.mxu0 0
    %251 = vmatmul.mubr.bf16.gmra.mrb[0].mxu0 %v160
    %v252 = vpop.f32.mrb[0].mxu0
    %v253 = vadd.f32 0.0, %v252
    %v254 = vpop.f32.mrb[0].mxu0
    %v255 = vpop.f32.mrb[0].mxu0
    %v256 = vadd.f32 0.0, %v255
    %v257 = vpop.f32.mrb[0].mxu0
    %258 = vmatprep.mubr.bf16.mxu0 0
    %259 = vmatmul.mubr.bf16.gmra.mrb[0].mxu0 %v161
    %v260 = vpop.f32.mrb[0].mxu0
    %v261 = vadd.f32 0.0, %v260
    %v262 = vpop.f32.mrb[0].mxu0
    %v263 = vpop.f32.mrb[0].mxu0
    %v264 = vadd.f32 0.0, %v263
    %v265 = vpop.f32.mrb[0].mxu0
    %266 = vdwg.mxu0
    %268 = vset.pattern.permute.xlu0 0
    %269 = vperm.xlu0 %268, %v66
    %v270 = vpop.permute.xlu0 %269
    %273 = vset.pattern.permute.xlu0 0
    %274 = vperm.xlu0 %273, %v67
    %v275 = vpop.permute.xlu0 %274
    %278 = vset.pattern.permute.xlu0 0
    %279 = vperm.xlu0 %278, %v68
    %v280 = vpop.permute.xlu0 %279
    %283 = vset.pattern.permute.xlu0 0
    %284 = vperm.xlu0 %283, %v69
    %v285 = vpop.permute.xlu0 %284
    %288 = vset.pattern.permute.xlu0 0
    %289 = vperm.xlu0 %288, %v70
    %v290 = vpop.permute.xlu0 %289
    %293 = vset.pattern.permute.xlu0 0
    %294 = vperm.xlu0 %293, %v71
    %v295 = vpop.permute.xlu0 %294
    %298 = vset.pattern.permute.xlu0 0
    %299 = vperm.xlu0 %298, %v72
    %v300 = vpop.permute.xlu0 %299
    %303 = vset.pattern.permute.xlu0 0
    %304 = vperm.xlu0 %303, %v73
    %v305 = vpop.permute.xlu0 %304
    %308 = vset.pattern.permute.xlu0 0
    %309 = vperm.xlu0 %308, %v74
    %v310 = vpop.permute.xlu0 %309
    %313 = vset.pattern.permute.xlu0 0
    %314 = vperm.xlu0 %313, %v75
    %v315 = vpop.permute.xlu0 %314
    %318 = vset.pattern.permute.xlu0 0
    %319 = vperm.xlu0 %318, %v76
    %v320 = vpop.permute.xlu0 %319
    %323 = vset.pattern.permute.xlu0 0
    %324 = vperm.xlu0 %323, %v77
    %v325 = vpop.permute.xlu0 %324
    %328 = vset.pattern.permute.xlu0 0
    %329 = vperm.xlu0 %328, %v78
    %v330 = vpop.permute.xlu0 %329
    %333 = vset.pattern.permute.xlu0 0
    %334 = vperm.xlu0 %333, %v79
    %v335 = vpop.permute.xlu0 %334
    %338 = vset.pattern.permute.xlu0 0
    %339 = vperm.xlu0 %338, %v80
    %v340 = vpop.permute.xlu0 %339
    %343 = vset.pattern.permute.xlu0 0
    %344 = vperm.xlu0 %343, %v81
    %v345 = vpop.permute.xlu0 %344
    %v347 = vmul.f32 %v205, %v270
    %v348 = vmul.f32 %v208, %v275
    %v349 = vmul.f32 %v213, %v280
    %v350 = vmul.f32 %v216, %v285
    %v351 = vmul.f32 %v221, %v290
    %v352 = vmul.f32 %v224, %v295
    %v353 = vmul.f32 %v229, %v300
    %v354 = vmul.f32 %v232, %v305
    %v355 = vmul.f32 %v237, %v310
    %v356 = vmul.f32 %v240, %v315
    %v357 = vmul.f32 %v245, %v320
    %v358 = vmul.f32 %v248, %v325
    %v359 = vmul.f32 %v253, %v330
    %v360 = vmul.f32 %v256, %v335
    %v361 = vmul.f32 %v261, %v340
    %v362 = vmul.f32 %v264, %v345
    %v363 = vld [vmem:[#allocation5] sm:$0xf]
    %v364 = vld [vmem:[#allocation5 + $0x4] sm:$0xf]
    %v365 = vld [vmem:[#allocation5 + $0x8] sm:$0xf]
    %v366 = vld [vmem:[#allocation5 + $0xc] sm:$0xf]
    %v367 = vld [vmem:[#allocation5 + $0x10] sm:$0xf]
    %v368 = vld [vmem:[#allocation5 + $0x14] sm:$0xf]
    %v369 = vld [vmem:[#allocation5 + $0x18] sm:$0xf]
    %v370 = vld [vmem:[#allocation5 + $0x1c] sm:$0xf]
    %v371 = vld [vmem:[#allocation5 + $0x20] sm:$0xf]
    %v372 = vld [vmem:[#allocation5 + $0x24] sm:$0xf]
    %v373 = vld [vmem:[#allocation5 + $0x28] sm:$0xf]
    %v374 = vld [vmem:[#allocation5 + $0x2c] sm:$0xf]
    %v375 = vld [vmem:[#allocation5 + $0x30] sm:$0xf]
    %v376 = vld [vmem:[#allocation5 + $0x34] sm:$0xf]
    %v377 = vld [vmem:[#allocation5 + $0x38] sm:$0xf]
    %v378 = vld [vmem:[#allocation5 + $0x3c] sm:$0xf]
    %v379 = vpack.c.bf16 %v348, %v347
    %v380 = vpack.c.bf16 %v350, %v349
    %v381 = vpack.c.bf16 %v352, %v351
    %v382 = vpack.c.bf16 %v354, %v353
    %v383 = vpack.c.bf16 %v356, %v355
    %v384 = vpack.c.bf16 %v358, %v357
    %v385 = vpack.c.bf16 %v360, %v359
    %v386 = vpack.c.bf16 %v362, %v361
    %v387 = vld [vmem:[#allocation7] sm:$0xf]
    %v388 = vld [vmem:[#allocation7 + $0x4] sm:$0xf]
    %v389 = vld [vmem:[#allocation7 + $0x8] sm:$0xf]
    %v390 = vld [vmem:[#allocation7 + $0xc] sm:$0xf]
    %v391 = vld [vmem:[#allocation7 + $0x10] sm:$0xf]
    %v392 = vld [vmem:[#allocation7 + $0x14] sm:$0xf]
    %v393 = vld [vmem:[#allocation7 + $0x18] sm:$0xf]
    %v394 = vld [vmem:[#allocation7 + $0x1c] sm:$0xf]
    %v395 = vld [vmem:[#allocation7 + $0x20] sm:$0xf]
    %v396 = vld [vmem:[#allocation7 + $0x24] sm:$0xf]
    %v397 = vld [vmem:[#allocation7 + $0x28] sm:$0xf]
    %v398 = vld [vmem:[#allocation7 + $0x2c] sm:$0xf]
    %v399 = vld [vmem:[#allocation7 + $0x30] sm:$0xf]
    %v400 = vld [vmem:[#allocation7 + $0x34] sm:$0xf]
    %v401 = vld [vmem:[#allocation7 + $0x38] sm:$0xf]
    %v402 = vld [vmem:[#allocation7 + $0x3c] sm:$0xf]
    %v419 = vunpack.c.l.b16 %v387
    %v420 = vunpack.c.l.b16 %v388
    %v421 = vunpack.c.l.b16 %v389
    %v422 = vunpack.c.l.b16 %v390
    %v423 = vunpack.c.l.b16 %v391
    %v424 = vunpack.c.l.b16 %v392
    %v425 = vunpack.c.l.b16 %v393
    %v426 = vunpack.c.l.b16 %v394
    %v427 = vunpack.c.l.b16 %v395
    %v428 = vunpack.c.l.b16 %v396
    %v429 = vunpack.c.l.b16 %v397
    %v430 = vunpack.c.l.b16 %v398
    %v431 = vunpack.c.l.b16 %v399
    %v432 = vunpack.c.l.b16 %v400
    %v433 = vunpack.c.l.b16 %v401
    %v434 = vunpack.c.l.b16 %v402
    %v435 = vpack.c.b16 %v420, %v419
    %v436 = vpack.c.b16 %v422, %v421
    %v437 = vpack.c.b16 %v424, %v423
    %v438 = vpack.c.b16 %v426, %v425
    %v439 = vpack.c.b16 %v428, %v427
    %v440 = vpack.c.b16 %v430, %v429
    %v441 = vpack.c.b16 %v432, %v431
    %v442 = vpack.c.b16 %v434, %v433
    %451 = vmatprep.subr.bf16.mxu0 0
    %452 = vmatpush1.bf16.msra.mxu0 %v435
    %453 = vmatprep.subr.bf16.mxu0 0
    %454 = vmatpush1.bf16.msra.mxu0 %v436
    %455 = vmatprep.subr.bf16.mxu0 0
    %456 = vmatpush1.bf16.msra.mxu0 %v437
    %457 = vmatprep.subr.bf16.mxu0 0
    %458 = vmatpush1.bf16.msra.mxu0 %v438
    %459 = vmatprep.subr.bf16.mxu0 0
    %460 = vmatpush1.bf16.msra.mxu0 %v439
    %461 = vmatprep.subr.bf16.mxu0 0
    %462 = vmatpush1.bf16.msra.mxu0 %v440
    %463 = vmatprep.subr.bf16.mxu0 0
    %464 = vmatpush1.bf16.msra.mxu0 %v441
    %465 = vmatprep.subr.bf16.mxu0 0
    %466 = vmatpush1.bf16.msra.mxu0 %v442
    %467 = vmatprep.subr.bf16.mxu0 0
    %468 = vmatpush1.bf16.msra.mxu0 0
    %469 = vmatprep.subr.bf16.mxu0 0
    %470 = vmatpush1.bf16.msra.mxu0 0
    %471 = vmatprep.subr.bf16.mxu0 0
    %472 = vmatpush1.bf16.msra.mxu0 0
    %473 = vmatprep.subr.bf16.mxu0 0
    %474 = vmatpush1.bf16.msra.mxu0 0
    %475 = vmatprep.subr.bf16.mxu0 0
    %476 = vmatpush1.bf16.msra.mxu0 0
    %477 = vmatprep.subr.bf16.mxu0 0
    %478 = vmatpush1.bf16.msra.mxu0 0
    %479 = vmatprep.subr.bf16.mxu0 0
    %480 = vmatpush1.bf16.msra.mxu0 0
    %481 = vmatprep.subr.bf16.mxu0 0
    %482 = vmatpush1.bf16.msra.mxu0 0
    %483 = vmatprep.mubr.bf16.mxu0 0
    %484 = vmatmul.mubr.bf16.gmra.mrb[0].mxu0 %v379
    %v485 = vpop.f32.mrb[0].mxu0
    %v486 = vadd.f32 0.0, %v485
    %v487 = vpop.f32.mrb[0].mxu0
    %v488 = vpop.f32.mrb[0].mxu0
    %v489 = vadd.f32 0.0, %v488
    %v490 = vpop.f32.mrb[0].mxu0
    %491 = vmatprep.mubr.bf16.mxu0 0
    %492 = vmatmul.mubr.bf16.gmra.mrb[0].mxu0 %v380
    %v493 = vpop.f32.mrb[0].mxu0
    %v494 = vadd.f32 0.0, %v493
    %v495 = vpop.f32.mrb[0].mxu0
    %v496 = vpop.f32.mrb[0].mxu0
    %v497 = vadd.f32 0.0, %v496
    %v498 = vpop.f32.mrb[0].mxu0
    %499 = vmatprep.mubr.bf16.mxu0 0
    %500 = vmatmul.mubr.bf16.gmra.mrb[0].mxu0 %v381
    %v501 = vpop.f32.mrb[0].mxu0
    %v502 = vadd.f32 0.0, %v501
    %v503 = vpop.f32.mrb[0].mxu0
    %v504 = vpop.f32.mrb[0].mxu0
    %v505 = vadd.f32 0.0, %v504
    %v506 = vpop.f32.mrb[0].mxu0
    %507 = vmatprep.mubr.bf16.mxu0 0
    %508 = vmatmul.mubr.bf16.gmra.mrb[0].mxu0 %v382
    %v509 = vpop.f32.mrb[0].mxu0
    %v510 = vadd.f32 0.0, %v509
    %v511 = vpop.f32.mrb[0].mxu0
    %v512 = vpop.f32.mrb[0].mxu0
    %v513 = vadd.f32 0.0, %v512
    %v514 = vpop.f32.mrb[0].mxu0
    %515 = vmatprep.mubr.bf16.mxu0 0
    %516 = vmatmul.mubr.bf16.gmra.mrb[0].mxu0 %v383
    %v517 = vpop.f32.mrb[0].mxu0
    %v518 = vadd.f32 0.0, %v517
    %v519 = vpop.f32.mrb[0].mxu0
    %v520 = vpop.f32.mrb[0].mxu0
    %v521 = vadd.f32 0.0, %v520
    %v522 = vpop.f32.mrb[0].mxu0
    %523 = vmatprep.mubr.bf16.mxu0 0
    %524 = vmatmul.mubr.bf16.gmra.mrb[0].mxu0 %v384
    %v525 = vpop.f32.mrb[0].mxu0
    %v526 = vadd.f32 0.0, %v525
    %v527 = vpop.f32.mrb[0].mxu0
    %v528 = vpop.f32.mrb[0].mxu0
    %v529 = vadd.f32 0.0, %v528
    %v530 = vpop.f32.mrb[0].mxu0
    %531 = vmatprep.mubr.bf16.mxu0 0
    %532 = vmatmul.mubr.bf16.gmra.mrb[0].mxu0 %v385
    %v533 = vpop.f32.mrb[0].mxu0
    %v534 = vadd.f32 0.0, %v533
    %v535 = vpop.f32.mrb[0].mxu0
    %v536 = vpop.f32.mrb[0].mxu0
    %v537 = vadd.f32 0.0, %v536
    %v538 = vpop.f32.mrb[0].mxu0
    %539 = vmatprep.mubr.bf16.mxu0 0
    %540 = vmatmul.mubr.bf16.gmra.mrb[0].mxu0 %v386
    %v541 = vpop.f32.mrb[0].mxu0
    %v542 = vadd.f32 0.0, %v541
    %v543 = vpop.f32.mrb[0].mxu0
    %v544 = vpop.f32.mrb[0].mxu0
    %v545 = vadd.f32 0.0, %v544
    %v546 = vpop.f32.mrb[0].mxu0
    %547 = vdwg.mxu0
    %v564 = vunpack.c.l.b16 %v363
    %v565 = vunpack.c.l.b16 %v364
    %v566 = vunpack.c.l.b16 %v365
    %v567 = vunpack.c.l.b16 %v366
    %v568 = vunpack.c.l.b16 %v367
    %v569 = vunpack.c.l.b16 %v368
    %v570 = vunpack.c.l.b16 %v369
    %v571 = vunpack.c.l.b16 %v370
    %v572 = vunpack.c.l.b16 %v371
    %v573 = vunpack.c.l.b16 %v372
    %v574 = vunpack.c.l.b16 %v373
    %v575 = vunpack.c.l.b16 %v374
    %v576 = vunpack.c.l.b16 %v375
    %v577 = vunpack.c.l.b16 %v376
    %v578 = vunpack.c.l.b16 %v377
    %v579 = vunpack.c.l.b16 %v378
    %v580 = vpack.c.b16 %v565, %v564
    %v581 = vpack.c.b16 %v567, %v566
    %v582 = vpack.c.b16 %v569, %v568
    %v583 = vpack.c.b16 %v571, %v570
    %v584 = vpack.c.b16 %v573, %v572
    %v585 = vpack.c.b16 %v575, %v574
    %v586 = vpack.c.b16 %v577, %v576
    %v587 = vpack.c.b16 %v579, %v578
    %596 = vmatprep.subr.bf16.mxu0 0
    %597 = vmatpush1.bf16.msra.mxu0 %v580
    %598 = vmatprep.subr.bf16.mxu0 0
    %599 = vmatpush1.bf16.msra.mxu0 %v581
    %600 = vmatprep.subr.bf16.mxu0 0
    %601 = vmatpush1.bf16.msra.mxu0 %v582
    %602 = vmatprep.subr.bf16.mxu0 0
    %603 = vmatpush1.bf16.msra.mxu0 %v583
    %604 = vmatprep.subr.bf16.mxu0 0
    %605 = vmatpush1.bf16.msra.mxu0 %v584
    %606 = vmatprep.subr.bf16.mxu0 0
    %607 = vmatpush1.bf16.msra.mxu0 %v585
    %608 = vmatprep.subr.bf16.mxu0 0
    %609 = vmatpush1.bf16.msra.mxu0 %v586
    %610 = vmatprep.subr.bf16.mxu0 0
    %611 = vmatpush1.bf16.msra.mxu0 %v587
    %612 = vmatprep.subr.bf16.mxu0 0
    %613 = vmatpush1.bf16.msra.mxu0 0
    %614 = vmatprep.subr.bf16.mxu0 0
    %615 = vmatpush1.bf16.msra.mxu0 0
    %616 = vmatprep.subr.bf16.mxu0 0
    %617 = vmatpush1.bf16.msra.mxu0 0
    %618 = vmatprep.subr.bf16.mxu0 0
    %619 = vmatpush1.bf16.msra.mxu0 0
    %620 = vmatprep.subr.bf16.mxu0 0
    %621 = vmatpush1.bf16.msra.mxu0 0
    %622 = vmatprep.subr.bf16.mxu0 0
    %623 = vmatpush1.bf16.msra.mxu0 0
    %624 = vmatprep.subr.bf16.mxu0 0
    %625 = vmatpush1.bf16.msra.mxu0 0
    %626 = vmatprep.subr.bf16.mxu0 0
    %627 = vmatpush1.bf16.msra.mxu0 0
    %628 = vmatprep.mubr.bf16.mxu0 0
    %629 = vmatmul.mubr.bf16.gmra.mrb[0].mxu0 %v98
    %v630 = vpop.f32.mrb[0].mxu0
    %v631 = vadd.f32 %v486, %v630
    %v632 = vpop.f32.mrb[0].mxu0
    %v633 = vpop.f32.mrb[0].mxu0
    %v634 = vadd.f32 %v489, %v633
    %v635 = vpop.f32.mrb[0].mxu0
    %636 = vmatprep.mubr.bf16.mxu0 0
    %637 = vmatmul.mubr.bf16.gmra.mrb[0].mxu0 %v99
    %v638 = vpop.f32.mrb[0].mxu0
    %v639 = vadd.f32 %v494, %v638
    %v640 = vpop.f32.mrb[0].mxu0
    %v641 = vpop.f32.mrb[0].mxu0
    %v642 = vadd.f32 %v497, %v641
    %v643 = vpop.f32.mrb[0].mxu0
    %644 = vmatprep.mubr.bf16.mxu0 0
    %645 = vmatmul.mubr.bf16.gmra.mrb[0].mxu0 %v100
    %v646 = vpop.f32.mrb[0].mxu0
    %v647 = vadd.f32 %v502, %v646
    %v648 = vpop.f32.mrb[0].mxu0
    %v649 = vpop.f32.mrb[0].mxu0
    %v650 = vadd.f32 %v505, %v649
    %v651 = vpop.f32.mrb[0].mxu0
    %652 = vmatprep.mubr.bf16.mxu0 0
    %653 = vmatmul.mubr.bf16.gmra.mrb[0].mxu0 %v101
    %v654 = vpop.f32.mrb[0].mxu0
    %v655 = vadd.f32 %v510, %v654
    %v656 = vpop.f32.mrb[0].mxu0
    %v657 = vpop.f32.mrb[0].mxu0
    %v658 = vadd.f32 %v513, %v657
    %v659 = vpop.f32.mrb[0].mxu0
    %660 = vmatprep.mubr.bf16.mxu0 0
    %661 = vmatmul.mubr.bf16.gmra.mrb[0].mxu0 %v102
    %v662 = vpop.f32.mrb[0].mxu0
    %v663 = vadd.f32 %v518, %v662
    %v664 = vpop.f32.mrb[0].mxu0
    %v665 = vpop.f32.mrb[0].mxu0
    %v666 = vadd.f32 %v521, %v665
    %v667 = vpop.f32.mrb[0].mxu0
    %668 = vmatprep.mubr.bf16.mxu0 0
    %669 = vmatmul.mubr.bf16.gmra.mrb[0].mxu0 %v103
    %v670 = vpop.f32.mrb[0].mxu0
    %v671 = vadd.f32 %v526, %v670
    %v672 = vpop.f32.mrb[0].mxu0
    %v673 = vpop.f32.mrb[0].mxu0
    %v674 = vadd.f32 %v529, %v673
    %v675 = vpop.f32.mrb[0].mxu0
    %676 = vmatprep.mubr.bf16.mxu0 0
    %677 = vmatmul.mubr.bf16.gmra.mrb[0].mxu0 %v104
    %v678 = vpop.f32.mrb[0].mxu0
    %v679 = vadd.f32 %v534, %v678
    %v680 = vpop.f32.mrb[0].mxu0
    %v681 = vpop.f32.mrb[0].mxu0
    %v682 = vadd.f32 %v537, %v681
    %v683 = vpop.f32.mrb[0].mxu0
    %684 = vmatprep.mubr.bf16.mxu0 0
    %685 = vmatmul.mubr.bf16.gmra.mrb[0].mxu0 %v105
    %v686 = vpop.f32.mrb[0].mxu0
    %v687 = vadd.f32 %v542, %v686
    %v688 = vpop.f32.mrb[0].mxu0
    %v689 = vpop.f32.mrb[0].mxu0
    %v690 = vadd.f32 %v545, %v689
    %v691 = vpop.f32.mrb[0].mxu0
    %692 = vdwg.mxu0
    %v693 = vld [vmem:[%s5] sm:$0x1]
    %v695 = vlaneseq
    %v696 = vshrl.u32 %v695, 7
    %v697 = vsub.s32 0, %v696
    %v698 = vrot.slane %v693, %v697
    %v700 = vadd.f32 %v631, %v698
    %v701 = vadd.f32 %v634, %v698
    %v702 = vadd.f32 %v639, %v698
    %v703 = vadd.f32 %v642, %v698
    %v704 = vadd.f32 %v647, %v698
    %v705 = vadd.f32 %v650, %v698
    %v706 = vadd.f32 %v655, %v698
    %v707 = vadd.f32 %v658, %v698
    %v708 = vadd.f32 %v663, %v698
    %v709 = vadd.f32 %v666, %v698
    %v710 = vadd.f32 %v671, %v698
    %v711 = vadd.f32 %v674, %v698
    %v712 = vadd.f32 %v679, %v698
    %v713 = vadd.f32 %v682, %v698
    %v714 = vadd.f32 %v687, %v698
    %v715 = vadd.f32 %v690, %v698
    %v716 = vmax.f32 %v700, 0.0
    %v717 = vmax.f32 %v701, 0.0
    %v718 = vmax.f32 %v702, 0.0
    %v719 = vmax.f32 %v703, 0.0
    %v720 = vmax.f32 %v704, 0.0
    %v721 = vmax.f32 %v705, 0.0
    %v722 = vmax.f32 %v706, 0.0
    %v723 = vmax.f32 %v707, 0.0
    %v724 = vmax.f32 %v708, 0.0
    %v725 = vmax.f32 %v709, 0.0
    %v726 = vmax.f32 %v710, 0.0
    %v727 = vmax.f32 %v711, 0.0
    %v728 = vmax.f32 %v712, 0.0
    %v729 = vmax.f32 %v713, 0.0
    %v730 = vmax.f32 %v714, 0.0
    %v731 = vmax.f32 %v715, 0.0
    %v732 = vpack.c.bf16 %v717, %v716
    %v733 = vpack.c.bf16 %v719, %v718
    %v734 = vpack.c.bf16 %v721, %v720
    %v735 = vpack.c.bf16 %v723, %v722
    %v736 = vpack.c.bf16 %v725, %v724
    %v737 = vpack.c.bf16 %v727, %v726
    %v738 = vpack.c.bf16 %v729, %v728
    %v739 = vpack.c.bf16 %v731, %v730
    %740 = vmatprep.subr.bf16.mxu0 0
    %741 = vmatpush1.bf16.msra.mxu0 %v732
    %742 = vmatprep.subr.bf16.mxu0 0
    %743 = vmatpush1.bf16.msra.mxu0 %v733
    %744 = vmatprep.subr.bf16.mxu0 0
    %745 = vmatpush1.bf16.msra.mxu0 %v734
    %746 = vmatprep.subr.bf16.mxu0 0
    %747 = vmatpush1.bf16.msra.mxu0 %v735
    %748 = vmatprep.subr.bf16.mxu0 0
    %749 = vmatpush1.bf16.msra.mxu0 %v736
    %750 = vmatprep.subr.bf16.mxu0 0
    %751 = vmatpush1.bf16.msra.mxu0 %v737
    %752 = vmatprep.subr.bf16.mxu0 0
    %753 = vmatpush1.bf16.msra.mxu0 %v738
    %754 = vmatprep.subr.bf16.mxu0 0
    %755 = vmatpush1.bf16.msra.mxu0 %v739
    %756 = vmatprep.subr.bf16.mxu0 0
    %757 = vmatpush1.bf16.msra.mxu0 0
    %758 = vmatprep.subr.bf16.mxu0 0
    %759 = vmatpush1.bf16.msra.mxu0 0
    %760 = vmatprep.subr.bf16.mxu0 0
    %761 = vmatpush1.bf16.msra.mxu0 0
    %762 = vmatprep.subr.bf16.mxu0 0
    %763 = vmatpush1.bf16.msra.mxu0 0
    %764 = vmatprep.subr.bf16.mxu0 0
    %765 = vmatpush1.bf16.msra.mxu0 0
    %766 = vmatprep.subr.bf16.mxu0 0
    %767 = vmatpush1.bf16.msra.mxu0 0
    %768 = vmatprep.subr.bf16.mxu0 0
    %769 = vmatpush1.bf16.msra.mxu0 0
    %770 = vmatprep.subr.bf16.mxu0 0
    %771 = vmatpush1.bf16.msra.mxu0 0
    %772 = vmatprep.mubr.bf16.mxu0 0
    %773 = vmatmul.mubr.bf16.gmra.mrb[0].mxu0 %v154
    %v774 = vpop.f32.mrb[0].mxu0
    %v775 = vadd.f32 0.0, %v774
    %v776 = vpop.f32.mrb[0].mxu0
    %v777 = vpop.f32.mrb[0].mxu0
    %v778 = vadd.f32 0.0, %v777
    %v779 = vpop.f32.mrb[0].mxu0
    %780 = vmatprep.mubr.bf16.mxu0 0
    %781 = vmatmul.mubr.bf16.gmra.mrb[0].mxu0 %v155
    %v782 = vpop.f32.mrb[0].mxu0
    %v783 = vadd.f32 0.0, %v782
    %v784 = vpop.f32.mrb[0].mxu0
    %v785 = vpop.f32.mrb[0].mxu0
    %v786 = vadd.f32 0.0, %v785
    %v787 = vpop.f32.mrb[0].mxu0
    %788 = vmatprep.mubr.bf16.mxu0 0
    %789 = vmatmul.mubr.bf16.gmra.mrb[0].mxu0 %v156
    %v790 = vpop.f32.mrb[0].mxu0
    %v791 = vadd.f32 0.0, %v790
    %v792 = vpop.f32.mrb[0].mxu0
    %v793 = vpop.f32.mrb[0].mxu0
    %v794 = vadd.f32 0.0, %v793
    %v795 = vpop.f32.mrb[0].mxu0
    %796 = vmatprep.mubr.bf16.mxu0 0
    %797 = vmatmul.mubr.bf16.gmra.mrb[0].mxu0 %v157
    %v798 = vpop.f32.mrb[0].mxu0
    %v799 = vadd.f32 0.0, %v798
    %v800 = vpop.f32.mrb[0].mxu0
    %v801 = vpop.f32.mrb[0].mxu0
    %v802 = vadd.f32 0.0, %v801
    %v803 = vpop.f32.mrb[0].mxu0
    %804 = vmatprep.mubr.bf16.mxu0 0
    %805 = vmatmul.mubr.bf16.gmra.mrb[0].mxu0 %v158
    %v806 = vpop.f32.mrb[0].mxu0
    %v807 = vadd.f32 0.0, %v806
    %v808 = vpop.f32.mrb[0].mxu0
    %v809 = vpop.f32.mrb[0].mxu0
    %v810 = vadd.f32 0.0, %v809
    %v811 = vpop.f32.mrb[0].mxu0
    %812 = vmatprep.mubr.bf16.mxu0 0
    %813 = vmatmul.mubr.bf16.gmra.mrb[0].mxu0 %v159
    %v814 = vpop.f32.mrb[0].mxu0
    %v815 = vadd.f32 0.0, %v814
    %v816 = vpop.f32.mrb[0].mxu0
    %v817 = vpop.f32.mrb[0].mxu0
    %v818 = vadd.f32 0.0, %v817
    %v819 = vpop.f32.mrb[0].mxu0
    %820 = vmatprep.mubr.bf16.mxu0 0
    %821 = vmatmul.mubr.bf16.gmra.mrb[0].mxu0 %v160
    %v822 = vpop.f32.mrb[0].mxu0
    %v823 = vadd.f32 0.0, %v822
    %v824 = vpop.f32.mrb[0].mxu0
    %v825 = vpop.f32.mrb[0].mxu0
    %v826 = vadd.f32 0.0, %v825
    %v827 = vpop.f32.mrb[0].mxu0
    %828 = vmatprep.mubr.bf16.mxu0 0
    %829 = vmatmul.mubr.bf16.gmra.mrb[0].mxu0 %v161
    %v830 = vpop.f32.mrb[0].mxu0
    %v831 = vadd.f32 0.0, %v830
    %v832 = vpop.f32.mrb[0].mxu0
    %v833 = vpop.f32.mrb[0].mxu0
    %v834 = vadd.f32 0.0, %v833
    %v835 = vpop.f32.mrb[0].mxu0
    %836 = vdwg.mxu0
    %v837 = vmul.f32 %v775, %v270
    %v838 = vmul.f32 %v778, %v275
    %v839 = vmul.f32 %v783, %v280
    %v840 = vmul.f32 %v786, %v285
    %v841 = vmul.f32 %v791, %v290
    %v842 = vmul.f32 %v794, %v295
    %v843 = vmul.f32 %v799, %v300
    %v844 = vmul.f32 %v802, %v305
    %v845 = vmul.f32 %v807, %v310
    %v846 = vmul.f32 %v810, %v315
    %v847 = vmul.f32 %v815, %v320
    %v848 = vmul.f32 %v818, %v325
    %v849 = vmul.f32 %v823, %v330
    %v850 = vmul.f32 %v826, %v335
    %v851 = vmul.f32 %v831, %v340
    %v852 = vmul.f32 %v834, %v345
    %s853 = scalar_lea.vmem [#allocation5], 64
    %v854 = vld [vmem:[%s853] sm:$0xf]
    %v855 = vld [vmem:[%s853 + $0x4] sm:$0xf]
    %v856 = vld [vmem:[%s853 + $0x8] sm:$0xf]
    %v857 = vld [vmem:[%s853 + $0xc] sm:$0xf]
    %v858 = vld [vmem:[%s853 + $0x10] sm:$0xf]
    %v859 = vld [vmem:[%s853 + $0x14] sm:$0xf]
    %v860 = vld [vmem:[%s853 + $0x18] sm:$0xf]
    %v861 = vld [vmem:[%s853 + $0x1c] sm:$0xf]
    %v862 = vld [vmem:[%s853 + $0x20] sm:$0xf]
    %v863 = vld [vmem:[%s853 + $0x24] sm:$0xf]
    %v864 = vld [vmem:[%s853 + $0x28] sm:$0xf]
    %v865 = vld [vmem:[%s853 + $0x2c] sm:$0xf]
    %v866 = vld [vmem:[%s853 + $0x30] sm:$0xf]
    %v867 = vld [vmem:[%s853 + $0x34] sm:$0xf]
    %v868 = vld [vmem:[%s853 + $0x38] sm:$0xf]
    %v869 = vld [vmem:[%s853 + $0x3c] sm:$0xf]
    %v870 = vpack.c.bf16 %v838, %v837
    %v871 = vpack.c.bf16 %v840, %v839
    %v872 = vpack.c.bf16 %v842, %v841
    %v873 = vpack.c.bf16 %v844, %v843
    %v874 = vpack.c.bf16 %v846, %v845
    %v875 = vpack.c.bf16 %v848, %v847
    %v876 = vpack.c.bf16 %v850, %v849
    %v877 = vpack.c.bf16 %v852, %v851
    %s878 = scalar_lea.vmem [#allocation7], 64
    %v879 = vld [vmem:[%s878] sm:$0xf]
    %v880 = vld [vmem:[%s878 + $0x4] sm:$0xf]
    %v881 = vld [vmem:[%s878 + $0x8] sm:$0xf]
    %v882 = vld [vmem:[%s878 + $0xc] sm:$0xf]
    %v883 = vld [vmem:[%s878 + $0x10] sm:$0xf]
    %v884 = vld [vmem:[%s878 + $0x14] sm:$0xf]
    %v885 = vld [vmem:[%s878 + $0x18] sm:$0xf]
    %v886 = vld [vmem:[%s878 + $0x1c] sm:$0xf]
    %v887 = vld [vmem:[%s878 + $0x20] sm:$0xf]
    %v888 = vld [vmem:[%s878 + $0x24] sm:$0xf]
    %v889 = vld [vmem:[%s878 + $0x28] sm:$0xf]
    %v890 = vld [vmem:[%s878 + $0x2c] sm:$0xf]
    %v891 = vld [vmem:[%s878 + $0x30] sm:$0xf]
    %v892 = vld [vmem:[%s878 + $0x34] sm:$0xf]
    %v893 = vld [vmem:[%s878 + $0x38] sm:$0xf]
    %v894 = vld [vmem:[%s878 + $0x3c] sm:$0xf]
    %v911 = vunpack.c.l.b16 %v879
    %v912 = vunpack.c.l.b16 %v880
    %v913 = vunpack.c.l.b16 %v881
    %v914 = vunpack.c.l.b16 %v882
    %v915 = vunpack.c.l.b16 %v883
    %v916 = vunpack.c.l.b16 %v884
    %v917 = vunpack.c.l.b16 %v885
    %v918 = vunpack.c.l.b16 %v886
    %v919 = vunpack.c.l.b16 %v887
    %v920 = vunpack.c.l.b16 %v888
    %v921 = vunpack.c.l.b16 %v889
    %v922 = vunpack.c.l.b16 %v890
    %v923 = vunpack.c.l.b16 %v891
    %v924 = vunpack.c.l.b16 %v892
    %v925 = vunpack.c.l.b16 %v893
    %v926 = vunpack.c.l.b16 %v894
    %v927 = vpack.c.b16 %v912, %v911
    %v928 = vpack.c.b16 %v914, %v913
    %v929 = vpack.c.b16 %v916, %v915
    %v930 = vpack.c.b16 %v918, %v917
    %v931 = vpack.c.b16 %v920, %v919
    %v932 = vpack.c.b16 %v922, %v921
    %v933 = vpack.c.b16 %v924, %v923
    %v934 = vpack.c.b16 %v926, %v925
    %943 = vmatprep.subr.bf16.mxu0 0
    %944 = vmatpush1.bf16.msra.mxu0 %v927
    %945 = vmatprep.subr.bf16.mxu0 0
    %946 = vmatpush1.bf16.msra.mxu0 %v928
    %947 = vmatprep.subr.bf16.mxu0 0
    %948 = vmatpush1.bf16.msra.mxu0 %v929
    %949 = vmatprep.subr.bf16.mxu0 0
    %950 = vmatpush1.bf16.msra.mxu0 %v930
    %951 = vmatprep.subr.bf16.mxu0 0
    %952 = vmatpush1.bf16.msra.mxu0 %v931
    %953 = vmatprep.subr.bf16.mxu0 0
    %954 = vmatpush1.bf16.msra.mxu0 %v932
    %955 = vmatprep.subr.bf16.mxu0 0
    %956 = vmatpush1.bf16.msra.mxu0 %v933
    %957 = vmatprep.subr.bf16.mxu0 0
    %958 = vmatpush1.bf16.msra.mxu0 %v934
    %959 = vmatprep.subr.bf16.mxu0 0
    %960 = vmatpush1.bf16.msra.mxu0 0
    %961 = vmatprep.subr.bf16.mxu0 0
    %962 = vmatpush1.bf16.msra.mxu0 0
    %963 = vmatprep.subr.bf16.mxu0 0
    %964 = vmatpush1.bf16.msra.mxu0 0
    %965 = vmatprep.subr.bf16.mxu0 0
    %966 = vmatpush1.bf16.msra.mxu0 0
    %967 = vmatprep.subr.bf16.mxu0 0
    %968 = vmatpush1.bf16.msra.mxu0 0
    %969 = vmatprep.subr.bf16.mxu0 0
    %970 = vmatpush1.bf16.msra.mxu0 0
    %971 = vmatprep.subr.bf16.mxu0 0
    %972 = vmatpush1.bf16.msra.mxu0 0
    %973 = vmatprep.subr.bf16.mxu0 0
    %974 = vmatpush1.bf16.msra.mxu0 0
    %975 = vmatprep.mubr.bf16.mxu0 0
    %976 = vmatmul.mubr.bf16.gmra.mrb[0].mxu0 %v870
    %v977 = vpop.f32.mrb[0].mxu0
    %v978 = vadd.f32 0.0, %v977
    %v979 = vpop.f32.mrb[0].mxu0
    %v980 = vpop.f32.mrb[0].mxu0
    %v981 = vadd.f32 0.0, %v980
    %v982 = vpop.f32.mrb[0].mxu0
    %983 = vmatprep.mubr.bf16.mxu0 0
    %984 = vmatmul.mubr.bf16.gmra.mrb[0].mxu0 %v871
    %v985 = vpop.f32.mrb[0].mxu0
    %v986 = vadd.f32 0.0, %v985
    %v987 = vpop.f32.mrb[0].mxu0
    %v988 = vpop.f32.mrb[0].mxu0
    %v989 = vadd.f32 0.0, %v988
    %v990 = vpop.f32.mrb[0].mxu0
    %991 = vmatprep.mubr.bf16.mxu0 0
    %992 = vmatmul.mubr.bf16.gmra.mrb[0].mxu0 %v872
    %v993 = vpop.f32.mrb[0].mxu0
    %v994 = vadd.f32 0.0, %v993
    %v995 = vpop.f32.mrb[0].mxu0
    %v996 = vpop.f32.mrb[0].mxu0
    %v997 = vadd.f32 0.0, %v996
    %v998 = vpop.f32.mrb[0].mxu0
    %999 = vmatprep.mubr.bf16.mxu0 0
    %1000 = vmatmul.mubr.bf16.gmra.mrb[0].mxu0 %v873
    %v1001 = vpop.f32.mrb[0].mxu0
    %v1002 = vadd.f32 0.0, %v1001
    %v1003 = vpop.f32.mrb[0].mxu0
    %v1004 = vpop.f32.mrb[0].mxu0
    %v1005 = vadd.f32 0.0, %v1004
    %v1006 = vpop.f32.mrb[0].mxu0
    %1007 = vmatprep.mubr.bf16.mxu0 0
    %1008 = vmatmul.mubr.bf16.gmra.mrb[0].mxu0 %v874
    %v1009 = vpop.f32.mrb[0].mxu0
    %v1010 = vadd.f32 0.0, %v1009
    %v1011 = vpop.f32.mrb[0].mxu0
    %v1012 = vpop.f32.mrb[0].mxu0
    %v1013 = vadd.f32 0.0, %v1012
    %v1014 = vpop.f32.mrb[0].mxu0
    %1015 = vmatprep.mubr.bf16.mxu0 0
    %1016 = vmatmul.mubr.bf16.gmra.mrb[0].mxu0 %v875
    %v1017 = vpop.f32.mrb[0].mxu0
    %v1018 = vadd.f32 0.0, %v1017
    %v1019 = vpop.f32.mrb[0].mxu0
    %v1020 = vpop.f32.mrb[0].mxu0
    %v1021 = vadd.f32 0.0, %v1020
    %v1022 = vpop.f32.mrb[0].mxu0
    %1023 = vmatprep.mubr.bf16.mxu0 0
    %1024 = vmatmul.mubr.bf16.gmra.mrb[0].mxu0 %v876
    %v1025 = vpop.f32.mrb[0].mxu0
    %v1026 = vadd.f32 0.0, %v1025
    %v1027 = vpop.f32.mrb[0].mxu0
    %v1028 = vpop.f32.mrb[0].mxu0
    %v1029 = vadd.f32 0.0, %v1028
    %v1030 = vpop.f32.mrb[0].mxu0
    %1031 = vmatprep.mubr.bf16.mxu0 0
    %1032 = vmatmul.mubr.bf16.gmra.mrb[0].mxu0 %v877
    %v1033 = vpop.f32.mrb[0].mxu0
    %v1034 = vadd.f32 0.0, %v1033
    %v1035 = vpop.f32.mrb[0].mxu0
    %v1036 = vpop.f32.mrb[0].mxu0
    %v1037 = vadd.f32 0.0, %v1036
    %v1038 = vpop.f32.mrb[0].mxu0
    %1039 = vdwg.mxu0
    %v1056 = vunpack.c.l.b16 %v854
    %v1057 = vunpack.c.l.b16 %v855
    %v1058 = vunpack.c.l.b16 %v856
    %v1059 = vunpack.c.l.b16 %v857
    %v1060 = vunpack.c.l.b16 %v858
    %v1061 = vunpack.c.l.b16 %v859
    %v1062 = vunpack.c.l.b16 %v860
    %v1063 = vunpack.c.l.b16 %v861
    %v1064 = vunpack.c.l.b16 %v862
    %v1065 = vunpack.c.l.b16 %v863
    %v1066 = vunpack.c.l.b16 %v864
    %v1067 = vunpack.c.l.b16 %v865
    %v1068 = vunpack.c.l.b16 %v866
    %v1069 = vunpack.c.l.b16 %v867
    %v1070 = vunpack.c.l.b16 %v868
    %v1071 = vunpack.c.l.b16 %v869
    %v1072 = vpack.c.b16 %v1057, %v1056
    %v1073 = vpack.c.b16 %v1059, %v1058
    %v1074 = vpack.c.b16 %v1061, %v1060
    %v1075 = vpack.c.b16 %v1063, %v1062
    %v1076 = vpack.c.b16 %v1065, %v1064
    %v1077 = vpack.c.b16 %v1067, %v1066
    %v1078 = vpack.c.b16 %v1069, %v1068
    %v1079 = vpack.c.b16 %v1071, %v1070
    %1088 = vmatprep.subr.bf16.mxu0 0
    %1089 = vmatpush1.bf16.msra.mxu0 %v1072
    %1090 = vmatprep.subr.bf16.mxu0 0
    %1091 = vmatpush1.bf16.msra.mxu0 %v1073
    %1092 = vmatprep.subr.bf16.mxu0 0
    %1093 = vmatpush1.bf16.msra.mxu0 %v1074
    %1094 = vmatprep.subr.bf16.mxu0 0
    %1095 = vmatpush1.bf16.msra.mxu0 %v1075
    %1096 = vmatprep.subr.bf16.mxu0 0
    %1097 = vmatpush1.bf16.msra.mxu0 %v1076
    %1098 = vmatprep.subr.bf16.mxu0 0
    %1099 = vmatpush1.bf16.msra.mxu0 %v1077
    %1100 = vmatprep.subr.bf16.mxu0 0
    %1101 = vmatpush1.bf16.msra.mxu0 %v1078
    %1102 = vmatprep.subr.bf16.mxu0 0
    %1103 = vmatpush1.bf16.msra.mxu0 %v1079
    %1104 = vmatprep.subr.bf16.mxu0 0
    %1105 = vmatpush1.bf16.msra.mxu0 0
    %1106 = vmatprep.subr.bf16.mxu0 0
    %1107 = vmatpush1.bf16.msra.mxu0 0
    %1108 = vmatprep.subr.bf16.mxu0 0
    %1109 = vmatpush1.bf16.msra.mxu0 0
    %1110 = vmatprep.subr.bf16.mxu0 0
    %1111 = vmatpush1.bf16.msra.mxu0 0
    %1112 = vmatprep.subr.bf16.mxu0 0
    %1113 = vmatpush1.bf16.msra.mxu0 0
    %1114 = vmatprep.subr.bf16.mxu0 0
    %1115 = vmatpush1.bf16.msra.mxu0 0
    %1116 = vmatprep.subr.bf16.mxu0 0
    %1117 = vmatpush1.bf16.msra.mxu0 0
    %1118 = vmatprep.subr.bf16.mxu0 0
    %1119 = vmatpush1.bf16.msra.mxu0 0
    %1120 = vmatprep.mubr.bf16.mxu0 0
    %1121 = vmatmul.mubr.bf16.gmra.mrb[0].mxu0 %v732
    %v1122 = vpop.f32.mrb[0].mxu0
    %v1123 = vadd.f32 %v978, %v1122
    %v1124 = vpop.f32.mrb[0].mxu0
    %v1125 = vpop.f32.mrb[0].mxu0
    %v1126 = vadd.f32 %v981, %v1125
    %v1127 = vpop.f32.mrb[0].mxu0
    %1128 = vmatprep.mubr.bf16.mxu0 0
    %1129 = vmatmul.mubr.bf16.gmra.mrb[0].mxu0 %v733
    %v1130 = vpop.f32.mrb[0].mxu0
    %v1131 = vadd.f32 %v986, %v1130
    %v1132 = vpop.f32.mrb[0].mxu0
    %v1133 = vpop.f32.mrb[0].mxu0
    %v1134 = vadd.f32 %v989, %v1133
    %v1135 = vpop.f32.mrb[0].mxu0
    %1136 = vmatprep.mubr.bf16.mxu0 0
    %1137 = vmatmul.mubr.bf16.gmra.mrb[0].mxu0 %v734
    %v1138 = vpop.f32.mrb[0].mxu0
    %v1139 = vadd.f32 %v994, %v1138
    %v1140 = vpop.f32.mrb[0].mxu0
    %v1141 = vpop.f32.mrb[0].mxu0
    %v1142 = vadd.f32 %v997, %v1141
    %v1143 = vpop.f32.mrb[0].mxu0
    %1144 = vmatprep.mubr.bf16.mxu0 0
    %1145 = vmatmul.mubr.bf16.gmra.mrb[0].mxu0 %v735
    %v1146 = vpop.f32.mrb[0].mxu0
    %v1147 = vadd.f32 %v1002, %v1146
    %v1148 = vpop.f32.mrb[0].mxu0
    %v1149 = vpop.f32.mrb[0].mxu0
    %v1150 = vadd.f32 %v1005, %v1149
    %v1151 = vpop.f32.mrb[0].mxu0
    %1152 = vmatprep.mubr.bf16.mxu0 0
    %1153 = vmatmul.mubr.bf16.gmra.mrb[0].mxu0 %v736
    %v1154 = vpop.f32.mrb[0].mxu0
    %v1155 = vadd.f32 %v1010, %v1154
    %v1156 = vpop.f32.mrb[0].mxu0
    %v1157 = vpop.f32.mrb[0].mxu0
    %v1158 = vadd.f32 %v1013, %v1157
    %v1159 = vpop.f32.mrb[0].mxu0
    %1160 = vmatprep.mubr.bf16.mxu0 0
    %1161 = vmatmul.mubr.bf16.gmra.mrb[0].mxu0 %v737
    %v1162 = vpop.f32.mrb[0].mxu0
    %v1163 = vadd.f32 %v1018, %v1162
    %v1164 = vpop.f32.mrb[0].mxu0
    %v1165 = vpop.f32.mrb[0].mxu0
    %v1166 = vadd.f32 %v1021, %v1165
    %v1167 = vpop.f32.mrb[0].mxu0
    %1168 = vmatprep.mubr.bf16.mxu0 0
    %1169 = vmatmul.mubr.bf16.gmra.mrb[0].mxu0 %v738
    %v1170 = vpop.f32.mrb[0].mxu0
    %v1171 = vadd.f32 %v1026, %v1170
    %v1172 = vpop.f32.mrb[0].mxu0
    %v1173 = vpop.f32.mrb[0].mxu0
    %v1174 = vadd.f32 %v1029, %v1173
    %v1175 = vpop.f32.mrb[0].mxu0
    %1176 = vmatprep.mubr.bf16.mxu0 0
    %1177 = vmatmul.mubr.bf16.gmra.mrb[0].mxu0 %v739
    %v1178 = vpop.f32.mrb[0].mxu0
    %v1179 = vadd.f32 %v1034, %v1178
    %v1180 = vpop.f32.mrb[0].mxu0
    %v1181 = vpop.f32.mrb[0].mxu0
    %v1182 = vadd.f32 %v1037, %v1181
    %v1183 = vpop.f32.mrb[0].mxu0
    %1184 = vdwg.mxu0
    %s1185 = scalar_lea.vmem %s5, 1
    %v1186 = vld [vmem:[%s1185] sm:$0x1]
    %v1188 = vlaneseq
    %v1189 = vshrl.u32 %v1188, 7
    %v1190 = vsub.s32 0, %v1189
    %v1191 = vrot.slane %v1186, %v1190
    %v1193 = vadd.f32 %v1123, %v1191
    %v1194 = vadd.f32 %v1126, %v1191
    %v1195 = vadd.f32 %v1131, %v1191
    %v1196 = vadd.f32 %v1134, %v1191
    %v1197 = vadd.f32 %v1139, %v1191
    %v1198 = vadd.f32 %v1142, %v1191
    %v1199 = vadd.f32 %v1147, %v1191
    %v1200 = vadd.f32 %v1150, %v1191
    %v1201 = vadd.f32 %v1155, %v1191
    %v1202 = vadd.f32 %v1158, %v1191
    %v1203 = vadd.f32 %v1163, %v1191
    %v1204 = vadd.f32 %v1166, %v1191
    %v1205 = vadd.f32 %v1171, %v1191
    %v1206 = vadd.f32 %v1174, %v1191
    %v1207 = vadd.f32 %v1179, %v1191
    %v1208 = vadd.f32 %v1182, %v1191
    %v1209 = vmax.f32 %v1193, 0.0
    %v1210 = vmax.f32 %v1194, 0.0
    %v1211 = vmax.f32 %v1195, 0.0
    %v1212 = vmax.f32 %v1196, 0.0
    %v1213 = vmax.f32 %v1197, 0.0
    %v1214 = vmax.f32 %v1198, 0.0
    %v1215 = vmax.f32 %v1199, 0.0
    %v1216 = vmax.f32 %v1200, 0.0
    %v1217 = vmax.f32 %v1201, 0.0
    %v1218 = vmax.f32 %v1202, 0.0
    %v1219 = vmax.f32 %v1203, 0.0
    %v1220 = vmax.f32 %v1204, 0.0
    %v1221 = vmax.f32 %v1205, 0.0
    %v1222 = vmax.f32 %v1206, 0.0
    %v1223 = vmax.f32 %v1207, 0.0
    %v1224 = vmax.f32 %v1208, 0.0
    %v1225 = vpack.c.bf16 %v1210, %v1209
    %v1226 = vpack.c.bf16 %v1212, %v1211
    %v1227 = vpack.c.bf16 %v1214, %v1213
    %v1228 = vpack.c.bf16 %v1216, %v1215
    %v1229 = vpack.c.bf16 %v1218, %v1217
    %v1230 = vpack.c.bf16 %v1220, %v1219
    %v1231 = vpack.c.bf16 %v1222, %v1221
    %v1232 = vpack.c.bf16 %v1224, %v1223
    %1233 = vmatprep.subr.bf16.mxu0 0
    %1234 = vmatpush1.bf16.msra.mxu0 %v1225
    %1235 = vmatprep.subr.bf16.mxu0 0
    %1236 = vmatpush1.bf16.msra.mxu0 %v1226
    %1237 = vmatprep.subr.bf16.mxu0 0
    %1238 = vmatpush1.bf16.msra.mxu0 %v1227
    %1239 = vmatprep.subr.bf16.mxu0 0
    %1240 = vmatpush1.bf16.msra.mxu0 %v1228
    %1241 = vmatprep.subr.bf16.mxu0 0
    %1242 = vmatpush1.bf16.msra.mxu0 %v1229
    %1243 = vmatprep.subr.bf16.mxu0 0
    %1244 = vmatpush1.bf16.msra.mxu0 %v1230
    %1245 = vmatprep.subr.bf16.mxu0 0
    %1246 = vmatpush1.bf16.msra.mxu0 %v1231
    %1247 = vmatprep.subr.bf16.mxu0 0
    %1248 = vmatpush1.bf16.msra.mxu0 %v1232
    %1249 = vmatprep.subr.bf16.mxu0 0
    %1250 = vmatpush1.bf16.msra.mxu0 0
    %1251 = vmatprep.subr.bf16.mxu0 0
    %1252 = vmatpush1.bf16.msra.mxu0 0
    %1253 = vmatprep.subr.bf16.mxu0 0
    %1254 = vmatpush1.bf16.msra.mxu0 0
    %1255 = vmatprep.subr.bf16.mxu0 0
    %1256 = vmatpush1.bf16.msra.mxu0 0
    %1257 = vmatprep.subr.bf16.mxu0 0
    %1258 = vmatpush1.bf16.msra.mxu0 0
    %1259 = vmatprep.subr.bf16.mxu0 0
    %1260 = vmatpush1.bf16.msra.mxu0 0
    %1261 = vmatprep.subr.bf16.mxu0 0
    %1262 = vmatpush1.bf16.msra.mxu0 0
    %1263 = vmatprep.subr.bf16.mxu0 0
    %1264 = vmatpush1.bf16.msra.mxu0 0
    %1265 = vmatprep.mubr.bf16.mxu0 0
    %1266 = vmatmul.mubr.bf16.gmra.mrb[0].mxu0 %v154
    %v1267 = vpop.f32.mrb[0].mxu0
    %v1268 = vadd.f32 0.0, %v1267
    %v1269 = vpop.f32.mrb[0].mxu0
    %v1270 = vpop.f32.mrb[0].mxu0
    %v1271 = vadd.f32 0.0, %v1270
    %v1272 = vpop.f32.mrb[0].mxu0
    %1273 = vmatprep.mubr.bf16.mxu0 0
    %1274 = vmatmul.mubr.bf16.gmra.mrb[0].mxu0 %v155
    %v1275 = vpop.f32.mrb[0].mxu0
    %v1276 = vadd.f32 0.0, %v1275
    %v1277 = vpop.f32.mrb[0].mxu0
    %v1278 = vpop.f32.mrb[0].mxu0
    %v1279 = vadd.f32 0.0, %v1278
    %v1280 = vpop.f32.mrb[0].mxu0
    %1281 = vmatprep.mubr.bf16.mxu0 0
    %1282 = vmatmul.mubr.bf16.gmra.mrb[0].mxu0 %v156
    %v1283 = vpop.f32.mrb[0].mxu0
    %v1284 = vadd.f32 0.0, %v1283
    %v1285 = vpop.f32.mrb[0].mxu0
    %v1286 = vpop.f32.mrb[0].mxu0
    %v1287 = vadd.f32 0.0, %v1286
    %v1288 = vpop.f32.mrb[0].mxu0
    %1289 = vmatprep.mubr.bf16.mxu0 0
    %1290 = vmatmul.mubr.bf16.gmra.mrb[0].mxu0 %v157
    %v1291 = vpop.f32.mrb[0].mxu0
    %v1292 = vadd.f32 0.0, %v1291
    %v1293 = vpop.f32.mrb[0].mxu0
    %v1294 = vpop.f32.mrb[0].mxu0
    %v1295 = vadd.f32 0.0, %v1294
    %v1296 = vpop.f32.mrb[0].mxu0
    %1297 = vmatprep.mubr.bf16.mxu0 0
    %1298 = vmatmul.mubr.bf16.gmra.mrb[0].mxu0 %v158
    %v1299 = vpop.f32.mrb[0].mxu0
    %v1300 = vadd.f32 0.0, %v1299
    %v1301 = vpop.f32.mrb[0].mxu0
    %v1302 = vpop.f32.mrb[0].mxu0
    %v1303 = vadd.f32 0.0, %v1302
    %v1304 = vpop.f32.mrb[0].mxu0
    %1305 = vmatprep.mubr.bf16.mxu0 0
    %1306 = vmatmul.mubr.bf16.gmra.mrb[0].mxu0 %v159
    %v1307 = vpop.f32.mrb[0].mxu0
    %v1308 = vadd.f32 0.0, %v1307
    %v1309 = vpop.f32.mrb[0].mxu0
    %v1310 = vpop.f32.mrb[0].mxu0
    %v1311 = vadd.f32 0.0, %v1310
    %v1312 = vpop.f32.mrb[0].mxu0
    %1313 = vmatprep.mubr.bf16.mxu0 0
    %1314 = vmatmul.mubr.bf16.gmra.mrb[0].mxu0 %v160
    %v1315 = vpop.f32.mrb[0].mxu0
    %v1316 = vadd.f32 0.0, %v1315
    %v1317 = vpop.f32.mrb[0].mxu0
    %v1318 = vpop.f32.mrb[0].mxu0
    %v1319 = vadd.f32 0.0, %v1318
    %v1320 = vpop.f32.mrb[0].mxu0
    %1321 = vmatprep.mubr.bf16.mxu0 0
    %1322 = vmatmul.mubr.bf16.gmra.mrb[0].mxu0 %v161
    %v1323 = vpop.f32.mrb[0].mxu0
    %v1324 = vadd.f32 0.0, %v1323
    %v1325 = vpop.f32.mrb[0].mxu0
    %v1326 = vpop.f32.mrb[0].mxu0
    %v1327 = vadd.f32 0.0, %v1326
    %v1328 = vpop.f32.mrb[0].mxu0
    %1329 = vdwg.mxu0
    %v1330 = vmul.f32 %v1268, %v270
    %v1331 = vmul.f32 %v1271, %v275
    %v1332 = vmul.f32 %v1276, %v280
    %v1333 = vmul.f32 %v1279, %v285
    %v1334 = vmul.f32 %v1284, %v290
    %v1335 = vmul.f32 %v1287, %v295
    %v1336 = vmul.f32 %v1292, %v300
    %v1337 = vmul.f32 %v1295, %v305
    %v1338 = vmul.f32 %v1300, %v310
    %v1339 = vmul.f32 %v1303, %v315
    %v1340 = vmul.f32 %v1308, %v320
    %v1341 = vmul.f32 %v1311, %v325
    %v1342 = vmul.f32 %v1316, %v330
    %v1343 = vmul.f32 %v1319, %v335
    %v1344 = vmul.f32 %v1324, %v340
    %v1345 = vmul.f32 %v1327, %v345
    %s1346 = scalar_lea.vmem [#allocation5], 128
    %v1347 = vld [vmem:[%s1346] sm:$0xf]
    %v1348 = vld [vmem:[%s1346 + $0x4] sm:$0xf]
    %v1349 = vld [vmem:[%s1346 + $0x8] sm:$0xf]
    %v1350 = vld [vmem:[%s1346 + $0xc] sm:$0xf]
    %v1351 = vld [vmem:[%s1346 + $0x10] sm:$0xf]
    %v1352 = vld [vmem:[%s1346 + $0x14] sm:$0xf]
    %v1353 = vld [vmem:[%s1346 + $0x18] sm:$0xf]
    %v1354 = vld [vmem:[%s1346 + $0x1c] sm:$0xf]
    %v1355 = vld [vmem:[%s1346 + $0x20] sm:$0xf]
    %v1356 = vld [vmem:[%s1346 + $0x24] sm:$0xf]
    %v1357 = vld [vmem:[%s1346 + $0x28] sm:$0xf]
    %v1358 = vld [vmem:[%s1346 + $0x2c] sm:$0xf]
    %v1359 = vld [vmem:[%s1346 + $0x30] sm:$0xf]
    %v1360 = vld [vmem:[%s1346 + $0x34] sm:$0xf]
    %v1361 = vld [vmem:[%s1346 + $0x38] sm:$0xf]
    %v1362 = vld [vmem:[%s1346 + $0x3c] sm:$0xf]
    %v1363 = vpack.c.bf16 %v1331, %v1330
    %v1364 = vpack.c.bf16 %v1333, %v1332
    %v1365 = vpack.c.bf16 %v1335, %v1334
    %v1366 = vpack.c.bf16 %v1337, %v1336
    %v1367 = vpack.c.bf16 %v1339, %v1338
    %v1368 = vpack.c.bf16 %v1341, %v1340
    %v1369 = vpack.c.bf16 %v1343, %v1342
    %v1370 = vpack.c.bf16 %v1345, %v1344
    %s1371 = scalar_lea.vmem [#allocation7], 128
    %v1372 = vld [vmem:[%s1371] sm:$0xf]
    %v1373 = vld [vmem:[%s1371 + $0x4] sm:$0xf]
    %v1374 = vld [vmem:[%s1371 + $0x8] sm:$0xf]
    %v1375 = vld [vmem:[%s1371 + $0xc] sm:$0xf]
    %v1376 = vld [vmem:[%s1371 + $0x10] sm:$0xf]
    %v1377 = vld [vmem:[%s1371 + $0x14] sm:$0xf]
    %v1378 = vld [vmem:[%s1371 + $0x18] sm:$0xf]
    %v1379 = vld [vmem:[%s1371 + $0x1c] sm:$0xf]
    %v1380 = vld [vmem:[%s1371 + $0x20] sm:$0xf]
    %v1381 = vld [vmem:[%s1371 + $0x24] sm:$0xf]
    %v1382 = vld [vmem:[%s1371 + $0x28] sm:$0xf]
    %v1383 = vld [vmem:[%s1371 + $0x2c] sm:$0xf]
    %v1384 = vld [vmem:[%s1371 + $0x30] sm:$0xf]
    %v1385 = vld [vmem:[%s1371 + $0x34] sm:$0xf]
    %v1386 = vld [vmem:[%s1371 + $0x38] sm:$0xf]
    %v1387 = vld [vmem:[%s1371 + $0x3c] sm:$0xf]
    %v1404 = vunpack.c.l.b16 %v1372
    %v1405 = vunpack.c.l.b16 %v1373
    %v1406 = vunpack.c.l.b16 %v1374
    %v1407 = vunpack.c.l.b16 %v1375
    %v1408 = vunpack.c.l.b16 %v1376
    %v1409 = vunpack.c.l.b16 %v1377
    %v1410 = vunpack.c.l.b16 %v1378
    %v1411 = vunpack.c.l.b16 %v1379
    %v1412 = vunpack.c.l.b16 %v1380
    %v1413 = vunpack.c.l.b16 %v1381
    %v1414 = vunpack.c.l.b16 %v1382
    %v1415 = vunpack.c.l.b16 %v1383
    %v1416 = vunpack.c.l.b16 %v1384
    %v1417 = vunpack.c.l.b16 %v1385
    %v1418 = vunpack.c.l.b16 %v1386
    %v1419 = vunpack.c.l.b16 %v1387
    %v1420 = vpack.c.b16 %v1405, %v1404
    %v1421 = vpack.c.b16 %v1407, %v1406
    %v1422 = vpack.c.b16 %v1409, %v1408
    %v1423 = vpack.c.b16 %v1411, %v1410
    %v1424 = vpack.c.b16 %v1413, %v1412
    %v1425 = vpack.c.b16 %v1415, %v1414
    %v1426 = vpack.c.b16 %v1417, %v1416
    %v1427 = vpack.c.b16 %v1419, %v1418
    %1436 = vmatprep.subr.bf16.mxu0 0
    %1437 = vmatpush1.bf16.msra.mxu0 %v1420
    %1438 = vmatprep.subr.bf16.mxu0 0
    %1439 = vmatpush1.bf16.msra.mxu0 %v1421
    %1440 = vmatprep.subr.bf16.mxu0 0
    %1441 = vmatpush1.bf16.msra.mxu0 %v1422
    %1442 = vmatprep.subr.bf16.mxu0 0
    %1443 = vmatpush1.bf16.msra.mxu0 %v1423
    %1444 = vmatprep.subr.bf16.mxu0 0
    %1445 = vmatpush1.bf16.msra.mxu0 %v1424
    %1446 = vmatprep.subr.bf16.mxu0 0
    %1447 = vmatpush1.bf16.msra.mxu0 %v1425
    %1448 = vmatprep.subr.bf16.mxu0 0
    %1449 = vmatpush1.bf16.msra.mxu0 %v1426
    %1450 = vmatprep.subr.bf16.mxu0 0
    %1451 = vmatpush1.bf16.msra.mxu0 %v1427
    %1452 = vmatprep.subr.bf16.mxu0 0
    %1453 = vmatpush1.bf16.msra.mxu0 0
    %1454 = vmatprep.subr.bf16.mxu0 0
    %1455 = vmatpush1.bf16.msra.mxu0 0
    %1456 = vmatprep.subr.bf16.mxu0 0
    %1457 = vmatpush1.bf16.msra.mxu0 0
    %1458 = vmatprep.subr.bf16.mxu0 0
    %1459 = vmatpush1.bf16.msra.mxu0 0
    %1460 = vmatprep.subr.bf16.mxu0 0
    %1461 = vmatpush1.bf16.msra.mxu0 0
    %1462 = vmatprep.subr.bf16.mxu0 0
    %1463 = vmatpush1.bf16.msra.mxu0 0
    %1464 = vmatprep.subr.bf16.mxu0 0
    %1465 = vmatpush1.bf16.msra.mxu0 0
    %1466 = vmatprep.subr.bf16.mxu0 0
    %1467 = vmatpush1.bf16.msra.mxu0 0
    %1468 = vmatprep.mubr.bf16.mxu0 0
    %1469 = vmatmul.mubr.bf16.gmra.mrb[0].mxu0 %v1363
    %v1470 = vpop.f32.mrb[0].mxu0
    %v1471 = vadd.f32 0.0, %v1470
    %v1472 = vpop.f32.mrb[0].mxu0
    %v1473 = vpop.f32.mrb[0].mxu0
    %v1474 = vadd.f32 0.0, %v1473
    %v1475 = vpop.f32.mrb[0].mxu0
    %1476 = vmatprep.mubr.bf16.mxu0 0
    %1477 = vmatmul.mubr.bf16.gmra.mrb[0].mxu0 %v1364
    %v1478 = vpop.f32.mrb[0].mxu0
    %v1479 = vadd.f32 0.0, %v1478
    %v1480 = vpop.f32.mrb[0].mxu0
    %v1481 = vpop.f32.mrb[0].mxu0
    %v1482 = vadd.f32 0.0, %v1481
    %v1483 = vpop.f32.mrb[0].mxu0
    %1484 = vmatprep.mubr.bf16.mxu0 0
    %1485 = vmatmul.mubr.bf16.gmra.mrb[0].mxu0 %v1365
    %v1486 = vpop.f32.mrb[0].mxu0
    %v1487 = vadd.f32 0.0, %v1486
    %v1488 = vpop.f32.mrb[0].mxu0
    %v1489 = vpop.f32.mrb[0].mxu0
    %v1490 = vadd.f32 0.0, %v1489
    %v1491 = vpop.f32.mrb[0].mxu0
    %1492 = vmatprep.mubr.bf16.mxu0 0
    %1493 = vmatmul.mubr.bf16.gmra.mrb[0].mxu0 %v1366
    %v1494 = vpop.f32.mrb[0].mxu0
    %v1495 = vadd.f32 0.0, %v1494
    %v1496 = vpop.f32.mrb[0].mxu0
    %v1497 = vpop.f32.mrb[0].mxu0
    %v1498 = vadd.f32 0.0, %v1497
    %v1499 = vpop.f32.mrb[0].mxu0
    %1500 = vmatprep.mubr.bf16.mxu0 0
    %1501 = vmatmul.mubr.bf16.gmra.mrb[0].mxu0 %v1367
    %v1502 = vpop.f32.mrb[0].mxu0
    %v1503 = vadd.f32 0.0, %v1502
    %v1504 = vpop.f32.mrb[0].mxu0
    %v1505 = vpop.f32.mrb[0].mxu0
    %v1506 = vadd.f32 0.0, %v1505
    %v1507 = vpop.f32.mrb[0].mxu0
    %1508 = vmatprep.mubr.bf16.mxu0 0
    %1509 = vmatmul.mubr.bf16.gmra.mrb[0].mxu0 %v1368
    %v1510 = vpop.f32.mrb[0].mxu0
    %v1511 = vadd.f32 0.0, %v1510
    %v1512 = vpop.f32.mrb[0].mxu0
    %v1513 = vpop.f32.mrb[0].mxu0
    %v1514 = vadd.f32 0.0, %v1513
    %v1515 = vpop.f32.mrb[0].mxu0
    %1516 = vmatprep.mubr.bf16.mxu0 0
    %1517 = vmatmul.mubr.bf16.gmra.mrb[0].mxu0 %v1369
    %v1518 = vpop.f32.mrb[0].mxu0
    %v1519 = vadd.f32 0.0, %v1518
    %v1520 = vpop.f32.mrb[0].mxu0
    %v1521 = vpop.f32.mrb[0].mxu0
    %v1522 = vadd.f32 0.0, %v1521
    %v1523 = vpop.f32.mrb[0].mxu0
    %1524 = vmatprep.mubr.bf16.mxu0 0
    %1525 = vmatmul.mubr.bf16.gmra.mrb[0].mxu0 %v1370
    %v1526 = vpop.f32.mrb[0].mxu0
    %v1527 = vadd.f32 0.0, %v1526
    %v1528 = vpop.f32.mrb[0].mxu0
    %v1529 = vpop.f32.mrb[0].mxu0
    %v1530 = vadd.f32 0.0, %v1529
    %v1531 = vpop.f32.mrb[0].mxu0
    %1532 = vdwg.mxu0
    %v1549 = vunpack.c.l.b16 %v1347
    %v1550 = vunpack.c.l.b16 %v1348
    %v1551 = vunpack.c.l.b16 %v1349
    %v1552 = vunpack.c.l.b16 %v1350
    %v1553 = vunpack.c.l.b16 %v1351
    %v1554 = vunpack.c.l.b16 %v1352
    %v1555 = vunpack.c.l.b16 %v1353
    %v1556 = vunpack.c.l.b16 %v1354
    %v1557 = vunpack.c.l.b16 %v1355
    %v1558 = vunpack.c.l.b16 %v1356
    %v1559 = vunpack.c.l.b16 %v1357
    %v1560 = vunpack.c.l.b16 %v1358
    %v1561 = vunpack.c.l.b16 %v1359
    %v1562 = vunpack.c.l.b16 %v1360
    %v1563 = vunpack.c.l.b16 %v1361
    %v1564 = vunpack.c.l.b16 %v1362
    %v1565 = vpack.c.b16 %v1550, %v1549
    %v1566 = vpack.c.b16 %v1552, %v1551
    %v1567 = vpack.c.b16 %v1554, %v1553
    %v1568 = vpack.c.b16 %v1556, %v1555
    %v1569 = vpack.c.b16 %v1558, %v1557
    %v1570 = vpack.c.b16 %v1560, %v1559
    %v1571 = vpack.c.b16 %v1562, %v1561
    %v1572 = vpack.c.b16 %v1564, %v1563
    %1581 = vmatprep.subr.bf16.mxu0 0
    %1582 = vmatpush1.bf16.msra.mxu0 %v1565
    %1583 = vmatprep.subr.bf16.mxu0 0
    %1584 = vmatpush1.bf16.msra.mxu0 %v1566
    %1585 = vmatprep.subr.bf16.mxu0 0
    %1586 = vmatpush1.bf16.msra.mxu0 %v1567
    %1587 = vmatprep.subr.bf16.mxu0 0
    %1588 = vmatpush1.bf16.msra.mxu0 %v1568
    %1589 = vmatprep.subr.bf16.mxu0 0
    %1590 = vmatpush1.bf16.msra.mxu0 %v1569
    %1591 = vmatprep.subr.bf16.mxu0 0
    %1592 = vmatpush1.bf16.msra.mxu0 %v1570
    %1593 = vmatprep.subr.bf16.mxu0 0
    %1594 = vmatpush1.bf16.msra.mxu0 %v1571
    %1595 = vmatprep.subr.bf16.mxu0 0
    %1596 = vmatpush1.bf16.msra.mxu0 %v1572
    %1597 = vmatprep.subr.bf16.mxu0 0
    %1598 = vmatpush1.bf16.msra.mxu0 0
    %1599 = vmatprep.subr.bf16.mxu0 0
    %1600 = vmatpush1.bf16.msra.mxu0 0
    %1601 = vmatprep.subr.bf16.mxu0 0
    %1602 = vmatpush1.bf16.msra.mxu0 0
    %1603 = vmatprep.subr.bf16.mxu0 0
    %1604 = vmatpush1.bf16.msra.mxu0 0
    %1605 = vmatprep.subr.bf16.mxu0 0
    %1606 = vmatpush1.bf16.msra.mxu0 0
    %1607 = vmatprep.subr.bf16.mxu0 0
    %1608 = vmatpush1.bf16.msra.mxu0 0
    %1609 = vmatprep.subr.bf16.mxu0 0
    %1610 = vmatpush1.bf16.msra.mxu0 0
    %1611 = vmatprep.subr.bf16.mxu0 0
    %1612 = vmatpush1.bf16.msra.mxu0 0
    %1613 = vmatprep.mubr.bf16.mxu0 0
    %1614 = vmatmul.mubr.bf16.gmra.mrb[0].mxu0 %v1225
    %v1615 = vpop.f32.mrb[0].mxu0
    %v1616 = vadd.f32 %v1471, %v1615
    %v1617 = vpop.f32.mrb[0].mxu0
    %v1618 = vpop.f32.mrb[0].mxu0
    %v1619 = vadd.f32 %v1474, %v1618
    %v1620 = vpop.f32.mrb[0].mxu0
    %1621 = vmatprep.mubr.bf16.mxu0 0
    %1622 = vmatmul.mubr.bf16.gmra.mrb[0].mxu0 %v1226
    %v1623 = vpop.f32.mrb[0].mxu0
    %v1624 = vadd.f32 %v1479, %v1623
    %v1625 = vpop.f32.mrb[0].mxu0
    %v1626 = vpop.f32.mrb[0].mxu0
    %v1627 = vadd.f32 %v1482, %v1626
    %v1628 = vpop.f32.mrb[0].mxu0
    %1629 = vmatprep.mubr.bf16.mxu0 0
    %1630 = vmatmul.mubr.bf16.gmra.mrb[0].mxu0 %v1227
    %v1631 = vpop.f32.mrb[0].mxu0
    %v1632 = vadd.f32 %v1487, %v1631
    %v1633 = vpop.f32.mrb[0].mxu0
    %v1634 = vpop.f32.mrb[0].mxu0
    %v1635 = vadd.f32 %v1490, %v1634
    %v1636 = vpop.f32.mrb[0].mxu0
    %1637 = vmatprep.mubr.bf16.mxu0 0
    %1638 = vmatmul.mubr.bf16.gmra.mrb[0].mxu0 %v1228
    %v1639 = vpop.f32.mrb[0].mxu0
    %v1640 = vadd.f32 %v1495, %v1639
    %v1641 = vpop.f32.mrb[0].mxu0
    %v1642 = vpop.f32.mrb[0].mxu0
    %v1643 = vadd.f32 %v1498, %v1642
    %v1644 = vpop.f32.mrb[0].mxu0
    %1645 = vmatprep.mubr.bf16.mxu0 0
    %1646 = vmatmul.mubr.bf16.gmra.mrb[0].mxu0 %v1229
    %v1647 = vpop.f32.mrb[0].mxu0
    %v1648 = vadd.f32 %v1503, %v1647
    %v1649 = vpop.f32.mrb[0].mxu0
    %v1650 = vpop.f32.mrb[0].mxu0
    %v1651 = vadd.f32 %v1506, %v1650
    %v1652 = vpop.f32.mrb[0].mxu0
    %1653 = vmatprep.mubr.bf16.mxu0 0
    %1654 = vmatmul.mubr.bf16.gmra.mrb[0].mxu0 %v1230
    %v1655 = vpop.f32.mrb[0].mxu0
    %v1656 = vadd.f32 %v1511, %v1655
    %v1657 = vpop.f32.mrb[0].mxu0
    %v1658 = vpop.f32.mrb[0].mxu0
    %v1659 = vadd.f32 %v1514, %v1658
    %v1660 = vpop.f32.mrb[0].mxu0
    %1661 = vmatprep.mubr.bf16.mxu0 0
    %1662 = vmatmul.mubr.bf16.gmra.mrb[0].mxu0 %v1231
    %v1663 = vpop.f32.mrb[0].mxu0
    %v1664 = vadd.f32 %v1519, %v1663
    %v1665 = vpop.f32.mrb[0].mxu0
    %v1666 = vpop.f32.mrb[0].mxu0
    %v1667 = vadd.f32 %v1522, %v1666
    %v1668 = vpop.f32.mrb[0].mxu0
    %1669 = vmatprep.mubr.bf16.mxu0 0
    %1670 = vmatmul.mubr.bf16.gmra.mrb[0].mxu0 %v1232
    %v1671 = vpop.f32.mrb[0].mxu0
    %v1672 = vadd.f32 %v1527, %v1671
    %v1673 = vpop.f32.mrb[0].mxu0
    %v1674 = vpop.f32.mrb[0].mxu0
    %v1675 = vadd.f32 %v1530, %v1674
    %v1676 = vpop.f32.mrb[0].mxu0
    %1677 = vdwg.mxu0
    %s1678 = scalar_lea.vmem %s5, 2
    %v1679 = vld [vmem:[%s1678] sm:$0x1]
    %v1681 = vlaneseq
    %v1682 = vshrl.u32 %v1681, 7
    %v1683 = vsub.s32 0, %v1682
    %v1684 = vrot.slane %v1679, %v1683
    %v1686 = vadd.f32 %v1616, %v1684
    %v1687 = vadd.f32 %v1619, %v1684
    %v1688 = vadd.f32 %v1624, %v1684
    %v1689 = vadd.f32 %v1627, %v1684
    %v1690 = vadd.f32 %v1632, %v1684
    %v1691 = vadd.f32 %v1635, %v1684
    %v1692 = vadd.f32 %v1640, %v1684
    %v1693 = vadd.f32 %v1643, %v1684
    %v1694 = vadd.f32 %v1648, %v1684
    %v1695 = vadd.f32 %v1651, %v1684
    %v1696 = vadd.f32 %v1656, %v1684
    %v1697 = vadd.f32 %v1659, %v1684
    %v1698 = vadd.f32 %v1664, %v1684
    %v1699 = vadd.f32 %v1667, %v1684
    %v1700 = vadd.f32 %v1672, %v1684
    %v1701 = vadd.f32 %v1675, %v1684
    %1702 = vst [vmem:[#allocation8] sm:$0xff] %v1686
    %1703 = vst [vmem:[#allocation8 + $0x8] sm:$0xff] %v1687
    %1704 = vst [vmem:[#allocation8 + $0x10] sm:$0xff] %v1688
    %1705 = vst [vmem:[#allocation8 + $0x18] sm:$0xff] %v1689
    %1706 = vst [vmem:[#allocation8 + $0x20] sm:$0xff] %v1690
    %1707 = vst [vmem:[#allocation8 + $0x28] sm:$0xff] %v1691
    %1708 = vst [vmem:[#allocation8 + $0x30] sm:$0xff] %v1692
    %1709 = vst [vmem:[#allocation8 + $0x38] sm:$0xff] %v1693
    %1710 = vst [vmem:[#allocation8 + $0x40] sm:$0xff] %v1694
    %1711 = vst [vmem:[#allocation8 + $0x48] sm:$0xff] %v1695
    %1712 = vst [vmem:[#allocation8 + $0x50] sm:$0xff] %v1696
    %1713 = vst [vmem:[#allocation8 + $0x58] sm:$0xff] %v1697
    %1714 = vst [vmem:[#allocation8 + $0x60] sm:$0xff] %v1698
    %1715 = vst [vmem:[#allocation8 + $0x68] sm:$0xff] %v1699
    %1716 = vst [vmem:[#allocation8 + $0x70] sm:$0xff] %v1700
    %1717 = vst [vmem:[#allocation8 + $0x78] sm:$0xff] %v1701
    // Predicated region
    $region38: #{tpu_custom_call.1} parent=1 // pred_check
      _
    $region39: #{tpu_custom_call.1} parent=1 // pred_check_branch
      %1719 = sbr.rel (0) target = $region41
    $region40: #{tpu_custom_call.1} parent=1 // pred_region
      %s1721 = ssub.s32 2048, 2048
      %1722 = vsyncadd [#allocation4], %s1721
      %s1723 = sshll.u32 [#allocation8], 4
      %s1724 = int_to_ptr.vmem [resolvable:$true] %s1723
      %1729 = dma.vmem_to_hbm [thread:$0]  %s1724, 2048, %s6, [#allocation4], 128, 128, 8
    $region41: #{tpu_custom_call.1} parent=1 // pred_fallthru
      _
    // Predicated region
    $region42: #{tpu_custom_call.1} parent=1 // pred_check
      _
    $region43: #{tpu_custom_call.1} parent=1 // pred_check_branch
      %1731 = sbr.rel (0) target = $region45
    $region44: #{tpu_custom_call.1} parent=1 // pred_region
      %1732 = dma.done [#allocation4], 2048
    $region45: #{tpu_custom_call.1} parent=1 // pred_fallthru
      _
    %1733 = vsyncpa [#allocation3], 1
    %1734 = vsyncpa [#allocation6], 1
    %1735 = vsyncpa [#allocation4], 1

</llo_original>
